<compile_context>
chip_gen: v7x
topology: tpu7x:2x2x1
jax: 0.10.0
libtpu: 0.0.40
codegen_flags: <defaults>
</compile_context>

<pallas_src>
import functools

import jax
import jax.numpy as jnp
from jax import lax
from jax.experimental import pallas as pl
from jax.experimental.pallas import tpu as pltpu

EPS = 1e-5
_VMEM_LIMIT = 32 * 1024 * 1024   # explicit scoped-VMEM budget (safe on v5e/v6e/v7x)


# ---------------------------------------------------------------------------
# Kernel 1: conv as a single im2col matmul + fused BN sum / sum-of-squares.
#   wt_ref : (Cout, K)      resident weights (K = 9 * Cin)
#   tap_ref: (K, RBLK)      lane-tile of the im2col matrix
#   y_ref  : (Cout, RBLK)   raw conv output tile (lane-dense store)
#   sum_ref, ssq_ref : (Cout, 1) grid-resident accumulators ("arbitrary" axis)
# ---------------------------------------------------------------------------
def _conv_stats_kernel(wt_ref, tap_ref, y_ref, sum_ref, ssq_ref):
    @pl.when(pl.program_id(0) == 0)
    def _init():
        sum_ref[...] = jnp.zeros_like(sum_ref)
        ssq_ref[...] = jnp.zeros_like(ssq_ref)

    # One MXU matmul per grid step, f32 accumulation.
    y = jnp.dot(wt_ref[...], tap_ref[...], preferred_element_type=jnp.float32)
    y_ref[...] = y
    # Per-channel partial stats: cross-lane reduces (XLU slot, ~free here).
    sum_ref[...] += jnp.sum(y, axis=1, keepdims=True)
    ssq_ref[...] += jnp.sum(y * y, axis=1, keepdims=True)


def _conv_stats(wt, tap, rblk, matmul_dtype):
    co, k = wt.shape
    _, r = tap.shape
    wt = wt.astype(matmul_dtype)
    tap = tap.astype(matmul_dtype)
    return pl.pallas_call(
        _conv_stats_kernel,
        out_shape=(
            jax.ShapeDtypeStruct((co, r), jnp.float32),   # raw conv output
            jax.ShapeDtypeStruct((co, 1), jnp.float32),   # per-channel sum
            jax.ShapeDtypeStruct((co, 1), jnp.float32),   # per-channel sum(x^2)
        ),
        grid=(r // rblk,),
        in_specs=[
            pl.BlockSpec((co, k), lambda i: (0, 0)),
            pl.BlockSpec((k, rblk), lambda i: (0, i)),
        ],
        out_specs=(
            pl.BlockSpec((co, rblk), lambda i: (0, i)),
            pl.BlockSpec((co, 1), lambda i: (0, 0)),      # resident accumulator
            pl.BlockSpec((co, 1), lambda i: (0, 0)),      # resident accumulator
        ),
        compiler_params=pltpu.CompilerParams(
            dimension_semantics=("arbitrary",),           # stats reduction axis
            vmem_limit_bytes=_VMEM_LIMIT),
    )(wt, tap)


# ---------------------------------------------------------------------------
# Kernel 2: BN normalize (training-mode batch stats) + ReLU.  Fully parallel.
# ---------------------------------------------------------------------------
def _bn_relu_kernel(y_ref, sum_ref, ssq_ref, g_ref, b_ref, o_ref, *, inv_count):
    mean = sum_ref[...] * inv_count
    var = ssq_ref[...] * inv_count - mean * mean          # E[x^2] - mean^2
    scale = g_ref[...] * lax.rsqrt(var + EPS)
    shift = b_ref[...] - mean * scale
    o_ref[...] = jnp.maximum(y_ref[...] * scale + shift, 0.0)


def _bn_relu(y, s, ss, gamma, beta, rblk):
    c, r = y.shape
    kernel = functools.partial(_bn_relu_kernel, inv_count=1.0 / r)
    return pl.pallas_call(
        kernel,
        out_shape=jax.ShapeDtypeStruct((c, r), jnp.float32),
        grid=(r // rblk,),
        in_specs=[
            pl.BlockSpec((c, rblk), lambda i: (0, i)),
            pl.BlockSpec((c, 1), lambda i: (0, 0)),
            pl.BlockSpec((c, 1), lambda i: (0, 0)),
            pl.BlockSpec((c, 1), lambda i: (0, 0)),
            pl.BlockSpec((c, 1), lambda i: (0, 0)),
        ],
        out_specs=pl.BlockSpec((c, rblk), lambda i: (0, i)),
        compiler_params=pltpu.CompilerParams(
            dimension_semantics=("parallel",),            # shards over TCs on v7x
            vmem_limit_bytes=_VMEM_LIMIT),
    )(y, s, ss, gamma, beta)


# ---------------------------------------------------------------------------
# Wrapper-side helpers (pure XLA layout plumbing — no heavy compute).
# ---------------------------------------------------------------------------
def _im2col_T(x_cnhw):
    """(C, N, H, W) -> (9*C, N*H*W) transposed im2col matrix, 3x3 / zero-pad 1."""
    c, n, h, w = x_cnhw.shape
    xp = jnp.pad(x_cnhw, ((0, 0), (0, 0), (1, 1), (1, 1)))
    taps = [xp[:, :, dy:dy + h, dx:dx + w]
            for dy in range(3) for dx in range(3)]        # 9 x (C, N, H, W)
    return jnp.stack(taps, axis=0).reshape(9 * c, n * h * w)


def _pick_rblk(r, cap=2048):
    """Largest lane-tile (multiple of 128) dividing R, bounded for VMEM."""
    for blk in (cap, 1024, 512, 256, 128):
        if blk <= r and r % blk == 0:
            return blk
    return r                                              # full-extent fallback


def double_normal_block(x_nchw, params, *, rblk=None, matmul_dtype=jnp.float32):
    """Forward pass of Double_Normal_Block (training-mode BatchNorm).

    x_nchw : (N, Cin, H, W) float32, PyTorch layout.
    params : (w1, b1, g1, bt1, w2, b2, g2, bt2) in PyTorch layouts
             (conv weights OIHW, per-channel 1-D vectors otherwise).
    Conv biases b1/b2 are accepted but unused: they are cancelled exactly by
    the training-mode BN mean subtraction.
    Set matmul_dtype=jnp.bfloat16 on v6e/v7x once channel counts make the
    convs MXU-bound (f32 accumulation is kept either way).
    """
    w1, _b1, g1, bt1, w2, _b2, g2, bt2 = params
    n, cin, h, w = x_nchw.shape
    cmid, cout = w1.shape[0], w2.shape[0]
    r = n * h * w
    if rblk is None:
        rblk = _pick_rblk(r)

    # ---- conv1 (single im2col matmul) + BN1 stats ----
    tap1 = _im2col_T(jnp.transpose(x_nchw, (1, 0, 2, 3)))           # (9*Cin, R)
    w1t = jnp.transpose(w1, (0, 2, 3, 1)).reshape(cmid, 9 * cin)    # (Cmid, 9*Cin)
    y1, s1, ss1 = _conv_stats(w1t, tap1, rblk, matmul_dtype)

    # ---- BN1 normalize + ReLU ----
    h1 = _bn_relu(y1, s1, ss1, g1.reshape(cmid, 1), bt1.reshape(cmid, 1), rblk)

    # ---- conv2 (single im2col matmul) + BN2 stats ----
    tap2 = _im2col_T(h1.reshape(cmid, n, h, w))                     # (9*Cmid, R)
    w2t = jnp.transpose(w2, (0, 2, 3, 1)).reshape(cout, 9 * cmid)   # (Cout, 9*Cmid)
    y2, s2, ss2 = _conv_stats(w2t, tap2, rblk, matmul_dtype)

    # ---- BN2 normalize + ReLU ----
    out = _bn_relu(y2, s2, ss2, g2.reshape(cout, 1), bt2.reshape(cout, 1), rblk)

    return jnp.transpose(out.reshape(cout, n, h, w), (1, 0, 2, 3))  # NCHW


# ---------------------------------------------------------------------------
# Pure-JAX reference of the PyTorch forward (training-mode BN, WITH conv bias).
# ---------------------------------------------------------------------------
def _reference(x, params):
    w1, b1, g1, bt1, w2, b2, g2, bt2 = params

    def conv(x, w, b):
        y = lax.conv_general_dilated(
            x, w, window_strides=(1, 1), padding=((1, 1), (1, 1)),
            dimension_numbers=("NCHW", "OIHW", "NCHW"))
        return y + b.reshape(1, -1, 1, 1)

    def bn_relu(y, g, bt):
        m = jnp.mean(y, axis=(0, 2, 3), keepdims=True)
        v = jnp.mean((y - m) ** 2, axis=(0, 2, 3), keepdims=True)
        y = (y - m) * lax.rsqrt(v + EPS) * g.reshape(1, -1, 1, 1) \
            + bt.reshape(1, -1, 1, 1)
        return jnp.maximum(y, 0.0)

    y = bn_relu(conv(x, w1, b1), g1, bt1)
    return bn_relu(conv(y, w2, b2), g2, bt2)


if __name__ == "__main__":
    # Small shapes consistent with the module: N=2, Cin=4, Cmid=Cout=8, 16x16.
    N, H, W = 2, 16, 16
    CIN, CMID, COUT = 4, 8, 8

    key = jax.random.PRNGKey(0)
    kx, kw1, kb1, kw2, kb2 = jax.random.split(key, 5)

    x = jax.random.normal(kx, (N, CIN, H, W), dtype=jnp.float32)

    w1 = jax.random.normal(kw1, (CMID, CIN, 3, 3), jnp.float32) * 0.1
    b1 = jax.random.normal(kb1, (CMID,), jnp.float32) * 0.1
    g1 = jnp.ones((CMID,), jnp.float32)      # bn1.weight
    bt1 = jnp.zeros((CMID,), jnp.float32)    # bn1.bias
    w2 = jax.random.normal(kw2, (COUT, CMID, 3, 3), jnp.float32) * 0.1
    b2 = jax.random.normal(kb2, (COUT,), jnp.float32) * 0.1
    g2 = jnp.ones((COUT,), jnp.float32)      # bn2.weight
    bt2 = jnp.zeros((COUT,), jnp.float32)    # bn2.bias

    params = (w1, b1, g1, bt1, w2, b2, g2, bt2)

    # rblk=128 gives a 4-step grid per call even at toy sizes, exercising the
    # pipelined lane-tiling and the grid-resident sum/sumsq accumulators.
    fwd = jax.jit(functools.partial(double_normal_block, rblk=128))
    out = jax.block_until_ready(fwd(x, params))
    ref = jax.block_until_ready(_reference(x, params))

    assert out.shape == (N, COUT, H, W)
    max_err = float(jnp.max(jnp.abs(out - ref)))
    assert jnp.allclose(out, ref, rtol=2e-4, atol=2e-4), max_err

    print("KERNEL_OK")
</pallas_src>

<mosaic_0001>
module attributes {stable_mosaic.version = 11 : i64} {
  func.func @_conv_stats_kernel(%arg0: i32, %arg1: memref<8x36xf32, #tpu.memory_space<vmem>>, %arg2: memref<36x128xf32, #tpu.memory_space<vmem>>, %arg3: memref<8x128xf32, #tpu.memory_space<vmem>>, %arg4: memref<8x1xf32, #tpu.memory_space<vmem>>, %arg5: memref<8x1xf32, #tpu.memory_space<vmem>>) attributes {dimension_semantics = [#tpu.dimension_semantics<arbitrary>], iteration_bounds = array<i64: 4>, scalar_prefetch = 0 : i64, scratch_operands = 0 : i64, tpu.core_type = #tpu.core_type<tc>, window_params = [{pipeline_mode = #tpu.pipeline_mode<synchronous>, transform_indices = @transform_0, window_bounds = array<i64: 8, 36>}, {transform_indices = @transform_1, window_bounds = array<i64: 36, 128>}, {transform_indices = @transform_2, window_bounds = array<i64: 8, 128>}, {pipeline_mode = #tpu.pipeline_mode<synchronous>, transform_indices = @transform_3, window_bounds = array<i64: 8, 1>}, {pipeline_mode = #tpu.pipeline_mode<synchronous>, transform_indices = @transform_4, window_bounds = array<i64: 8, 1>}]} {
    %c0_i32 = arith.constant 0 : i32
    %0 = arith.cmpi eq, %arg0, %c0_i32 : i32
    %1 = arith.extui %0 : i1 to i32
    %c0_i32_0 = arith.constant 0 : i32
    %2 = arith.cmpi ne, %1, %c0_i32_0 : i32
    scf.if %2 {
      %cst_16 = arith.constant 0.000000e+00 : f32
      %18 = vector.broadcast %cst_16 : f32 to vector<8x1xf32>
      %c0_17 = arith.constant 0 : index
      %c0_18 = arith.constant 0 : index
      %19 = vector.load %arg4[%c0_17, %c0_18] : memref<8x1xf32, #tpu.memory_space<vmem>>, vector<8x1xf32>
      tpu.vector_store %arg4[%c0_17, %c0_18], %18 {strides = array<i32>} : memref<8x1xf32, #tpu.memory_space<vmem>>, vector<8x1xf32>,
      %cst_19 = arith.constant 0.000000e+00 : f32
      %20 = vector.broadcast %cst_19 : f32 to vector<8x1xf32>
      %c0_20 = arith.constant 0 : index
      %c0_21 = arith.constant 0 : index
      %21 = vector.load %arg5[%c0_20, %c0_21] : memref<8x1xf32, #tpu.memory_space<vmem>>, vector<8x1xf32>
      tpu.vector_store %arg5[%c0_20, %c0_21], %20 {strides = array<i32>} : memref<8x1xf32, #tpu.memory_space<vmem>>, vector<8x1xf32>,
    } else {
    }
    %c0 = arith.constant 0 : index
    %c0_1 = arith.constant 0 : index
    %3 = vector.load %arg1[%c0, %c0_1] : memref<8x36xf32, #tpu.memory_space<vmem>>, vector<8x36xf32>
    %c0_2 = arith.constant 0 : index
    %c0_3 = arith.constant 0 : index
    %4 = vector.load %arg2[%c0_2, %c0_3] : memref<36x128xf32, #tpu.memory_space<vmem>>, vector<36x128xf32>
    %cst = arith.constant dense<0.000000e+00> : vector<8x128xf32>
    %5 = tpu.matmul %3, %4, %cst {dimension_numbers = #tpu.dot_dimension_numbers<[1], [0], [0], [1], [0, 0, 1, 1], [], []>} : vector<8x36xf32>, vector<36x128xf32>, vector<8x128xf32> -> vector<8x128xf32>
    %c0_4 = arith.constant 0 : index
    %c0_5 = arith.constant 0 : index
    %6 = vector.load %arg3[%c0_4, %c0_5] : memref<8x128xf32, #tpu.memory_space<vmem>>, vector<8x128xf32>
    tpu.vector_store %arg3[%c0_4, %c0_5], %5 {strides = array<i32>} : memref<8x128xf32, #tpu.memory_space<vmem>>, vector<8x128xf32>,
    %c0_6 = arith.constant 0 : index
    %c0_7 = arith.constant 0 : index
    %7 = vector.load %arg4[%c0_6, %c0_7] : memref<8x1xf32, #tpu.memory_space<vmem>>, vector<8x1xf32>
    %cst_8 = arith.constant dense<0.000000e+00> : vector<8xf32>
    %8 = vector.multi_reduction <add>, %5, %cst_8 [1] : vector<8x128xf32> to vector<8xf32>
    %9 = vector.shape_cast %8 : vector<8xf32> to vector<8x1xf32>
    %10 = arith.addf %7, %9 : vector<8x1xf32>
    %c0_9 = arith.constant 0 : index
    %c0_10 = arith.constant 0 : index
    %11 = vector.load %arg4[%c0_9, %c0_10] : memref<8x1xf32, #tpu.memory_space<vmem>>, vector<8x1xf32>
    tpu.vector_store %arg4[%c0_9, %c0_10], %10 {strides = array<i32>} : memref<8x1xf32, #tpu.memory_space<vmem>>, vector<8x1xf32>,
    %c0_11 = arith.constant 0 : index
    %c0_12 = arith.constant 0 : index
    %12 = vector.load %arg5[%c0_11, %c0_12] : memref<8x1xf32, #tpu.memory_space<vmem>>, vector<8x1xf32>
    %13 = arith.mulf %5, %5 : vector<8x128xf32>
    %cst_13 = arith.constant dense<0.000000e+00> : vector<8xf32>
    %14 = vector.multi_reduction <add>, %13, %cst_13 [1] : vector<8x128xf32> to vector<8xf32>
    %15 = vector.shape_cast %14 : vector<8xf32> to vector<8x1xf32>
    %16 = arith.addf %12, %15 : vector<8x1xf32>
    %c0_14 = arith.constant 0 : index
    %c0_15 = arith.constant 0 : index
    %17 = vector.load %arg5[%c0_14, %c0_15] : memref<8x1xf32, #tpu.memory_space<vmem>>, vector<8x1xf32>
    tpu.vector_store %arg5[%c0_14, %c0_15], %16 {strides = array<i32>} : memref<8x1xf32, #tpu.memory_space<vmem>>, vector<8x1xf32>,
    return
  }
  func.func @transform_0(%arg0: i32) -> (i32, i32) {
    %c0_i32 = arith.constant 0 : i32
    %c0_i32_0 = arith.constant 0 : i32
    %c0_i32_1 = arith.constant 0 : i32
    return %c0_i32, %c0_i32_0 : i32, i32
  }
  func.func @transform_1(%arg0: i32) -> (i32, i32) {
    %c0_i32 = arith.constant 0 : i32
    %c0_i32_0 = arith.constant 0 : i32
    return %c0_i32, %arg0 : i32, i32
  }
  func.func @transform_2(%arg0: i32) -> (i32, i32) {
    %c0_i32 = arith.constant 0 : i32
    %c0_i32_0 = arith.constant 0 : i32
    return %c0_i32, %arg0 : i32, i32
  }
  func.func @transform_3(%arg0: i32) -> (i32, i32) {
    %c0_i32 = arith.constant 0 : i32
    %c0_i32_0 = arith.constant 0 : i32
    %c0_i32_1 = arith.constant 0 : i32
    return %c0_i32, %c0_i32_0 : i32, i32
  }
  func.func @transform_4(%arg0: i32) -> (i32, i32) {
    %c0_i32 = arith.constant 0 : i32
    %c0_i32_0 = arith.constant 0 : i32
    %c0_i32_1 = arith.constant 0 : i32
    return %c0_i32, %c0_i32_0 : i32, i32
  }
}

module attributes {stable_mosaic.version = 11 : i64} {
  func.func @_bn_relu_kernel(%arg0: i32, %arg1: memref<8x128xf32, #tpu.memory_space<vmem>>, %arg2: memref<8x1xf32, #tpu.memory_space<vmem>>, %arg3: memref<8x1xf32, #tpu.memory_space<vmem>>, %arg4: memref<8x1xf32, #tpu.memory_space<vmem>>, %arg5: memref<8x1xf32, #tpu.memory_space<vmem>>, %arg6: memref<8x128xf32, #tpu.memory_space<vmem>>) attributes {dimension_semantics = [#tpu.dimension_semantics<parallel>], iteration_bounds = array<i64: 4>, scalar_prefetch = 0 : i64, scratch_operands = 0 : i64, tpu.core_type = #tpu.core_type<tc>, window_params = [{transform_indices = @transform_0, window_bounds = array<i64: 8, 128>}, {pipeline_mode = #tpu.pipeline_mode<synchronous>, transform_indices = @transform_1, window_bounds = array<i64: 8, 1>}, {pipeline_mode = #tpu.pipeline_mode<synchronous>, transform_indices = @transform_2, window_bounds = array<i64: 8, 1>}, {pipeline_mode = #tpu.pipeline_mode<synchronous>, transform_indices = @transform_3, window_bounds = array<i64: 8, 1>}, {pipeline_mode = #tpu.pipeline_mode<synchronous>, transform_indices = @transform_4, window_bounds = array<i64: 8, 1>}, {transform_indices = @transform_5, window_bounds = array<i64: 8, 128>}]} {
    %c0 = arith.constant 0 : index
    %c0_0 = arith.constant 0 : index
    %0 = vector.load %arg2[%c0, %c0_0] : memref<8x1xf32, #tpu.memory_space<vmem>>, vector<8x1xf32>
    %cst = arith.constant 0.001953125 : f32
    %1 = vector.broadcast %cst : f32 to vector<8x1xf32>
    %2 = arith.mulf %0, %1 : vector<8x1xf32>
    %c0_1 = arith.constant 0 : index
    %c0_2 = arith.constant 0 : index
    %3 = vector.load %arg3[%c0_1, %c0_2] : memref<8x1xf32, #tpu.memory_space<vmem>>, vector<8x1xf32>
    %cst_3 = arith.constant 0.001953125 : f32
    %4 = vector.broadcast %cst_3 : f32 to vector<8x1xf32>
    %5 = arith.mulf %3, %4 : vector<8x1xf32>
    %6 = arith.mulf %2, %2 : vector<8x1xf32>
    %7 = arith.subf %5, %6 : vector<8x1xf32>
    %c0_4 = arith.constant 0 : index
    %c0_5 = arith.constant 0 : index
    %8 = vector.load %arg4[%c0_4, %c0_5] : memref<8x1xf32, #tpu.memory_space<vmem>>, vector<8x1xf32>
    %cst_6 = arith.constant 9.99999974E-6 : f32
    %9 = vector.broadcast %cst_6 : f32 to vector<8x1xf32>
    %10 = arith.addf %7, %9 : vector<8x1xf32>
    %11 = math.rsqrt %10 : vector<8x1xf32>
    %12 = arith.mulf %8, %11 : vector<8x1xf32>
    %c0_7 = arith.constant 0 : index
    %c0_8 = arith.constant 0 : index
    %13 = vector.load %arg5[%c0_7, %c0_8] : memref<8x1xf32, #tpu.memory_space<vmem>>, vector<8x1xf32>
    %14 = arith.mulf %2, %12 : vector<8x1xf32>
    %15 = arith.subf %13, %14 : vector<8x1xf32>
    %c0_9 = arith.constant 0 : index
    %c0_10 = arith.constant 0 : index
    %16 = vector.load %arg1[%c0_9, %c0_10] : memref<8x128xf32, #tpu.memory_space<vmem>>, vector<8x128xf32>
    %17 = vector.broadcast %12 : vector<8x1xf32> to vector<8x128xf32>
    %18 = arith.mulf %16, %17 : vector<8x128xf32>
    %19 = vector.broadcast %15 : vector<8x1xf32> to vector<8x128xf32>
    %20 = arith.addf %18, %19 : vector<8x128xf32>
    %cst_11 = arith.constant 0.000000e+00 : f32
    %21 = vector.broadcast %cst_11 : f32 to vector<8x128xf32>
    %22 = arith.maximumf %20, %21 : vector<8x128xf32>
    %c0_12 = arith.constant 0 : index
    %c0_13 = arith.constant 0 : index
    %23 = vector.load %arg6[%c0_12, %c0_13] : memref<8x128xf32, #tpu.memory_space<vmem>>, vector<8x128xf32>
    tpu.vector_store %arg6[%c0_12, %c0_13], %22 {strides = array<i32>} : memref<8x128xf32, #tpu.memory_space<vmem>>, vector<8x128xf32>,
    return
  }
  func.func @transform_0(%arg0: i32) -> (i32, i32) {
    %c0_i32 = arith.constant 0 : i32
    %c0_i32_0 = arith.constant 0 : i32
    return %c0_i32, %arg0 : i32, i32
  }
  func.func @transform_1(%arg0: i32) -> (i32, i32) {
    %c0_i32 = arith.constant 0 : i32
    %c0_i32_0 = arith.constant 0 : i32
    %c0_i32_1 = arith.constant 0 : i32
    return %c0_i32, %c0_i32_0 : i32, i32
  }
  func.func @transform_2(%arg0: i32) -> (i32, i32) {
    %c0_i32 = arith.constant 0 : i32
    %c0_i32_0 = arith.constant 0 : i32
    %c0_i32_1 = arith.constant 0 : i32
    return %c0_i32, %c0_i32_0 : i32, i32
  }
  func.func @transform_3(%arg0: i32) -> (i32, i32) {
    %c0_i32 = arith.constant 0 : i32
    %c0_i32_0 = arith.constant 0 : i32
    %c0_i32_1 = arith.constant 0 : i32
    return %c0_i32, %c0_i32_0 : i32, i32
  }
  func.func @transform_4(%arg0: i32) -> (i32, i32) {
    %c0_i32 = arith.constant 0 : i32
    %c0_i32_0 = arith.constant 0 : i32
    %c0_i32_1 = arith.constant 0 : i32
    return %c0_i32, %c0_i32_0 : i32, i32
  }
  func.func @transform_5(%arg0: i32) -> (i32, i32) {
    %c0_i32 = arith.constant 0 : i32
    %c0_i32_0 = arith.constant 0 : i32
    return %c0_i32, %arg0 : i32, i32
  }
}

module attributes {stable_mosaic.version = 11 : i64} {
  func.func @_conv_stats_kernel(%arg0: i32, %arg1: memref<8x72xf32, #tpu.memory_space<vmem>>, %arg2: memref<72x128xf32, #tpu.memory_space<vmem>>, %arg3: memref<8x128xf32, #tpu.memory_space<vmem>>, %arg4: memref<8x1xf32, #tpu.memory_space<vmem>>, %arg5: memref<8x1xf32, #tpu.memory_space<vmem>>) attributes {dimension_semantics = [#tpu.dimension_semantics<arbitrary>], iteration_bounds = array<i64: 4>, scalar_prefetch = 0 : i64, scratch_operands = 0 : i64, tpu.core_type = #tpu.core_type<tc>, window_params = [{pipeline_mode = #tpu.pipeline_mode<synchronous>, transform_indices = @transform_0, window_bounds = array<i64: 8, 72>}, {transform_indices = @transform_1, window_bounds = array<i64: 72, 128>}, {transform_indices = @transform_2, window_bounds = array<i64: 8, 128>}, {pipeline_mode = #tpu.pipeline_mode<synchronous>, transform_indices = @transform_3, window_bounds = array<i64: 8, 1>}, {pipeline_mode = #tpu.pipeline_mode<synchronous>, transform_indices = @transform_4, window_bounds = array<i64: 8, 1>}]} {
    %c0_i32 = arith.constant 0 : i32
    %0 = arith.cmpi eq, %arg0, %c0_i32 : i32
    %1 = arith.extui %0 : i1 to i32
    %c0_i32_0 = arith.constant 0 : i32
    %2 = arith.cmpi ne, %1, %c0_i32_0 : i32
    scf.if %2 {
      %cst_16 = arith.constant 0.000000e+00 : f32
      %18 = vector.broadcast %cst_16 : f32 to vector<8x1xf32>
      %c0_17 = arith.constant 0 : index
      %c0_18 = arith.constant 0 : index
      %19 = vector.load %arg4[%c0_17, %c0_18] : memref<8x1xf32, #tpu.memory_space<vmem>>, vector<8x1xf32>
      tpu.vector_store %arg4[%c0_17, %c0_18], %18 {strides = array<i32>} : memref<8x1xf32, #tpu.memory_space<vmem>>, vector<8x1xf32>,
      %cst_19 = arith.constant 0.000000e+00 : f32
      %20 = vector.broadcast %cst_19 : f32 to vector<8x1xf32>
      %c0_20 = arith.constant 0 : index
      %c0_21 = arith.constant 0 : index
      %21 = vector.load %arg5[%c0_20, %c0_21] : memref<8x1xf32, #tpu.memory_space<vmem>>, vector<8x1xf32>
      tpu.vector_store %arg5[%c0_20, %c0_21], %20 {strides = array<i32>} : memref<8x1xf32, #tpu.memory_space<vmem>>, vector<8x1xf32>,
    } else {
    }
    %c0 = arith.constant 0 : index
    %c0_1 = arith.constant 0 : index
    %3 = vector.load %arg1[%c0, %c0_1] : memref<8x72xf32, #tpu.memory_space<vmem>>, vector<8x72xf32>
    %c0_2 = arith.constant 0 : index
    %c0_3 = arith.constant 0 : index
    %4 = vector.load %arg2[%c0_2, %c0_3] : memref<72x128xf32, #tpu.memory_space<vmem>>, vector<72x128xf32>
    %cst = arith.constant dense<0.000000e+00> : vector<8x128xf32>
    %5 = tpu.matmul %3, %4, %cst {dimension_numbers = #tpu.dot_dimension_numbers<[1], [0], [0], [1], [0, 0, 1, 1], [], []>} : vector<8x72xf32>, vector<72x128xf32>, vector<8x128xf32> -> vector<8x128xf32>
    %c0_4 = arith.constant 0 : index
    %c0_5 = arith.constant 0 : index
    %6 = vector.load %arg3[%c0_4, %c0_5] : memref<8x128xf32, #tpu.memory_space<vmem>>, vector<8x128xf32>
    tpu.vector_store %arg3[%c0_4, %c0_5], %5 {strides = array<i32>} : memref<8x128xf32, #tpu.memory_space<vmem>>, vector<8x128xf32>,
    %c0_6 = arith.constant 0 : index
    %c0_7 = arith.constant 0 : index
    %7 = vector.load %arg4[%c0_6, %c0_7] : memref<8x1xf32, #tpu.memory_space<vmem>>, vector<8x1xf32>
    %cst_8 = arith.constant dense<0.000000e+00> : vector<8xf32>
    %8 = vector.multi_reduction <add>, %5, %cst_8 [1] : vector<8x128xf32> to vector<8xf32>
    %9 = vector.shape_cast %8 : vector<8xf32> to vector<8x1xf32>
    %10 = arith.addf %7, %9 : vector<8x1xf32>
    %c0_9 = arith.constant 0 : index
    %c0_10 = arith.constant 0 : index
    %11 = vector.load %arg4[%c0_9, %c0_10] : memref<8x1xf32, #tpu.memory_space<vmem>>, vector<8x1xf32>
    tpu.vector_store %arg4[%c0_9, %c0_10], %10 {strides = array<i32>} : memref<8x1xf32, #tpu.memory_space<vmem>>, vector<8x1xf32>,
    %c0_11 = arith.constant 0 : index
    %c0_12 = arith.constant 0 : index
    %12 = vector.load %arg5[%c0_11, %c0_12] : memref<8x1xf32, #tpu.memory_space<vmem>>, vector<8x1xf32>
    %13 = arith.mulf %5, %5 : vector<8x128xf32>
    %cst_13 = arith.constant dense<0.000000e+00> : vector<8xf32>
    %14 = vector.multi_reduction <add>, %13, %cst_13 [1] : vector<8x128xf32> to vector<8xf32>
    %15 = vector.shape_cast %14 : vector<8xf32> to vector<8x1xf32>
    %16 = arith.addf %12, %15 : vector<8x1xf32>
    %c0_14 = arith.constant 0 : index
    %c0_15 = arith.constant 0 : index
    %17 = vector.load %arg5[%c0_14, %c0_15] : memref<8x1xf32, #tpu.memory_space<vmem>>, vector<8x1xf32>
    tpu.vector_store %arg5[%c0_14, %c0_15], %16 {strides = array<i32>} : memref<8x1xf32, #tpu.memory_space<vmem>>, vector<8x1xf32>,
    return
  }
  func.func @transform_0(%arg0: i32) -> (i32, i32) {
    %c0_i32 = arith.constant 0 : i32
    %c0_i32_0 = arith.constant 0 : i32
    %c0_i32_1 = arith.constant 0 : i32
    return %c0_i32, %c0_i32_0 : i32, i32
  }
  func.func @transform_1(%arg0: i32) -> (i32, i32) {
    %c0_i32 = arith.constant 0 : i32
    %c0_i32_0 = arith.constant 0 : i32
    return %c0_i32, %arg0 : i32, i32
  }
  func.func @transform_2(%arg0: i32) -> (i32, i32) {
    %c0_i32 = arith.constant 0 : i32
    %c0_i32_0 = arith.constant 0 : i32
    return %c0_i32, %arg0 : i32, i32
  }
  func.func @transform_3(%arg0: i32) -> (i32, i32) {
    %c0_i32 = arith.constant 0 : i32
    %c0_i32_0 = arith.constant 0 : i32
    %c0_i32_1 = arith.constant 0 : i32
    return %c0_i32, %c0_i32_0 : i32, i32
  }
  func.func @transform_4(%arg0: i32) -> (i32, i32) {
    %c0_i32 = arith.constant 0 : i32
    %c0_i32_0 = arith.constant 0 : i32
    %c0_i32_1 = arith.constant 0 : i32
    return %c0_i32, %c0_i32_0 : i32, i32
  }
}

</mosaic_0001>

<llo_original>
// kernel: double_normal_block.5
$region0: #{double_normal_block.5}
  #allocation0 [shape = 'u32[]', space=smem, size = 0x4, offset = 0x4, fixed_abs, tag = 'smem constant byte address 0x4 - core index']
  #allocation1 [shape = 'u32[144,128]{1,0:T(1,128)}', space=vmem, size = 0x12000, scoped, tag = 'internal scratch']
  %s0 = inlined_call_operand.vmem [shape: f32[8,512], index: 0, kind: input, shape index: {}]
  %s1 = inlined_call_operand.vmem [shape: f32[8,1], index: 1, kind: input, shape index: {}]
  %s2 = inlined_call_operand.vmem [shape: f32[8,1], index: 2, kind: input, shape index: {}]
  %s3 = inlined_call_operand.vmem [shape: f32[8,1], index: 3, kind: input, shape index: {}]
  %s4 = inlined_call_operand.vmem [shape: f32[8,1], index: 4, kind: input, shape index: {}]
  %s5 = inlined_call_operand.vmem [shape: f32[8,512], index: 5, kind: output, shape index: {}]
  %s6 = sld [smem:[#allocation0]]
  $region53: #{double_normal_block.5} parent=0
    _
  %s8 = ssub.s32 1, %s6
  %s9 = scalar_select 0, %s8, %s6
  loop: start=0, step=1, limit=6
  $region2: #{double_normal_block.5} parent=0 // loop_pre_header
    _
  $region3: #{double_normal_block.5} parent=0 // loop_header
    %s11 = sphi 0, %s15
    %p12 = scmp.ge.s32.totalorder %s11, 6
    %s21 = sphi 0, %s23
    %s24 = sphi 0, %s21
    %s25 = sphi 0, %s24
    %s41 = sphi 0, %s25
    %s45 = sphi 0, %s45
    %s47 = sphi 0, %s45
    %s48 = sphi 0, %s47
    %s62 = sphi 0, %s48
    %s66 = sphi 0, %s66
    %s68 = sphi 0, %s66
    %s69 = sphi 0, %s68
    %s83 = sphi 0, %s69
    %s87 = sphi 0, %s87
    %s89 = sphi 0, %s87
    %s90 = sphi 0, %s89
    %s104 = sphi 0, %s90
    %s108 = sphi 0, %s108
    %s110 = sphi 0, %s108
    %s111 = sphi 0, %s110
    %s125 = sphi 0, %s111
    %s131 = sphi 0, %s133
    %s134 = sphi 0, %s131
    %s135 = sphi 0, %s134
    %s151 = sphi 0, %s135
  $region4: #{double_normal_block.5} parent=0 // loop_header_branch
    %14 = sbr.rel (%p12) target = $region8
  $region5: #{double_normal_block.5} parent=0 // loop_body
    %s16 = ssub.s32 %s11, 1
    %s17 = ssub.s32 %s11, 2
    %s18 = sadd.s32 %s11, 1
    %s19 = ssub.s32 %s11, %s18
    %p20 = scmp.eq.s32.totalorder %s19, 0
    %s22 = sadd.s32 %s21, 1
    %s23 = scalar_select %p20, %s21, %s22
    %p26 = pneg %p20
    %p27 = scmp.eq.s32.totalorder %s11, 3
    %p28 = por %p26, %p27
    %p29 = scmp.ne.s32.totalorder %s21, %s24
    %p30 = scmp.eq.s32.totalorder %s11, 0
    %p31 = por %p29, %p30
    %p32 = scmp.ne.s32.totalorder %s21, %s24
    %p33 = scmp.eq.s32.totalorder %s16, 3
    %p34 = por %p32, %p33
    %p35 = scmp.ne.s32.totalorder %s24, %s25
    %p36 = scmp.eq.s32.totalorder %s16, 0
    %p37 = por %p35, %p36
    %p38 = scmp.ne.s32.totalorder %s24, %s25
    %p39 = scmp.eq.s32.totalorder %s17, 3
    %p40 = por %p38, %p39
    %p42 = scmp.ne.s32.totalorder %s25, %s41
    %p43 = scmp.eq.s32.totalorder %s17, 0
    %p44 = por %p42, %p43
    %s46 = sadd.s32 %s45, 1
    %p49 = scmp.eq.s32.totalorder %s11, 3
    %p50 = scmp.ne.s32.totalorder %s45, %s47
    %p51 = scmp.eq.s32.totalorder %s11, 0
    %p52 = por %p50, %p51
    %p53 = scmp.ne.s32.totalorder %s45, %s47
    %p54 = scmp.eq.s32.totalorder %s16, 3
    %p55 = por %p53, %p54
    %p56 = scmp.ne.s32.totalorder %s47, %s48
    %p57 = scmp.eq.s32.totalorder %s16, 0
    %p58 = por %p56, %p57
    %p59 = scmp.ne.s32.totalorder %s47, %s48
    %p60 = scmp.eq.s32.totalorder %s17, 3
    %p61 = por %p59, %p60
    %p63 = scmp.ne.s32.totalorder %s48, %s62
    %p64 = scmp.eq.s32.totalorder %s17, 0
    %p65 = por %p63, %p64
    %s67 = sadd.s32 %s66, 1
    %p70 = scmp.eq.s32.totalorder %s11, 3
    %p71 = scmp.ne.s32.totalorder %s66, %s68
    %p72 = scmp.eq.s32.totalorder %s11, 0
    %p73 = por %p71, %p72
    %p74 = scmp.ne.s32.totalorder %s66, %s68
    %p75 = scmp.eq.s32.totalorder %s16, 3
    %p76 = por %p74, %p75
    %p77 = scmp.ne.s32.totalorder %s68, %s69
    %p78 = scmp.eq.s32.totalorder %s16, 0
    %p79 = por %p77, %p78
    %p80 = scmp.ne.s32.totalorder %s68, %s69
    %p81 = scmp.eq.s32.totalorder %s17, 3
    %p82 = por %p80, %p81
    %p84 = scmp.ne.s32.totalorder %s69, %s83
    %p85 = scmp.eq.s32.totalorder %s17, 0
    %p86 = por %p84, %p85
    %s88 = sadd.s32 %s87, 1
    %p91 = scmp.eq.s32.totalorder %s11, 3
    %p92 = scmp.ne.s32.totalorder %s87, %s89
    %p93 = scmp.eq.s32.totalorder %s11, 0
    %p94 = por %p92, %p93
    %p95 = scmp.ne.s32.totalorder %s87, %s89
    %p96 = scmp.eq.s32.totalorder %s16, 3
    %p97 = por %p95, %p96
    %p98 = scmp.ne.s32.totalorder %s89, %s90
    %p99 = scmp.eq.s32.totalorder %s16, 0
    %p100 = por %p98, %p99
    %p101 = scmp.ne.s32.totalorder %s89, %s90
    %p102 = scmp.eq.s32.totalorder %s17, 3
    %p103 = por %p101, %p102
    %p105 = scmp.ne.s32.totalorder %s90, %s104
    %p106 = scmp.eq.s32.totalorder %s17, 0
    %p107 = por %p105, %p106
    %s109 = sadd.s32 %s108, 1
    %p112 = scmp.eq.s32.totalorder %s11, 3
    %p113 = scmp.ne.s32.totalorder %s108, %s110
    %p114 = scmp.eq.s32.totalorder %s11, 0
    %p115 = por %p113, %p114
    %p116 = scmp.ne.s32.totalorder %s108, %s110
    %p117 = scmp.eq.s32.totalorder %s16, 3
    %p118 = por %p116, %p117
    %p119 = scmp.ne.s32.totalorder %s110, %s111
    %p120 = scmp.eq.s32.totalorder %s16, 0
    %p121 = por %p119, %p120
    %p122 = scmp.ne.s32.totalorder %s110, %s111
    %p123 = scmp.eq.s32.totalorder %s17, 3
    %p124 = por %p122, %p123
    %p126 = scmp.ne.s32.totalorder %s111, %s125
    %p127 = scmp.eq.s32.totalorder %s17, 0
    %p128 = por %p126, %p127
    %s129 = ssub.s32 %s11, %s18
    %p130 = scmp.eq.s32.totalorder %s129, 0
    %s132 = sadd.s32 %s131, 1
    %s133 = scalar_select %p130, %s131, %s132
    %p136 = pneg %p130
    %p137 = scmp.eq.s32.totalorder %s11, 3
    %p138 = por %p136, %p137
    %p139 = scmp.ne.s32.totalorder %s131, %s134
    %p140 = scmp.eq.s32.totalorder %s11, 0
    %p141 = por %p139, %p140
    %p142 = scmp.ne.s32.totalorder %s131, %s134
    %p143 = scmp.eq.s32.totalorder %s16, 3
    %p144 = por %p142, %p143
    %p145 = scmp.ne.s32.totalorder %s134, %s135
    %p146 = scmp.eq.s32.totalorder %s16, 0
    %p147 = por %p145, %p146
    %p148 = scmp.ne.s32.totalorder %s134, %s135
    %p149 = scmp.eq.s32.totalorder %s17, 3
    %p150 = por %p148, %p149
    %p152 = scmp.ne.s32.totalorder %s135, %s151
    %p153 = scmp.eq.s32.totalorder %s17, 0
    %p154 = por %p152, %p153
    %p155 = scmp.le.s32.totalorder 1, %s11
    %p156 = scmp.lt.s32.totalorder %s11, 5
    %p157 = pnand %p155, %p156
    %p158 = pneg %p157
    // Predicated region
    $region9: #{double_normal_block.5} parent=5 // pred_check
      _
    $region10: #{double_normal_block.5} parent=5 // pred_check_branch
      %160 = sbr.rel (%p157) target = $region12
    $region11: #{double_normal_block.5} parent=5 // pred_region
      %s161 = ssub.s32 %s11, 1
      // Predicated region
      $region13: #{double_normal_block.5} parent=11 // pred_check
        %p162 = pneg %p58
      $region14: #{double_normal_block.5} parent=11 // pred_check_branch
        %164 = sbr.rel (%p162) target = $region16
      $region15: #{double_normal_block.5} parent=11 // pred_region
        _
      $region16: #{double_normal_block.5} parent=11 // pred_fallthru
        _
      // Predicated region
      $region17: #{double_normal_block.5} parent=11 // pred_check
        %p165 = pneg %p79
      $region18: #{double_normal_block.5} parent=11 // pred_check_branch
        %167 = sbr.rel (%p165) target = $region20
      $region19: #{double_normal_block.5} parent=11 // pred_region
        _
      $region20: #{double_normal_block.5} parent=11 // pred_fallthru
        _
      // Predicated region
      $region21: #{double_normal_block.5} parent=11 // pred_check
        %p168 = pneg %p100
      $region22: #{double_normal_block.5} parent=11 // pred_check_branch
        %170 = sbr.rel (%p168) target = $region24
      $region23: #{double_normal_block.5} parent=11 // pred_region
        _
      $region24: #{double_normal_block.5} parent=11 // pred_fallthru
        _
      // Predicated region
      $region25: #{double_normal_block.5} parent=11 // pred_check
        %p171 = pneg %p121
      $region26: #{double_normal_block.5} parent=11 // pred_check_branch
        %173 = sbr.rel (%p171) target = $region28
      $region27: #{double_normal_block.5} parent=11 // pred_region
        _
      $region28: #{double_normal_block.5} parent=11 // pred_fallthru
        _
    $region12: #{double_normal_block.5} parent=5 // pred_fallthru
      _
    %p174 = scmp.lt.s32.totalorder %s11, 4
    // Predicated region
    $region29: #{double_normal_block.5} parent=5 // pred_check
      %p175 = pneg %p174
    $region30: #{double_normal_block.5} parent=5 // pred_check_branch
      %177 = sbr.rel (%p175) target = $region32
    $region31: #{double_normal_block.5} parent=5 // pred_region
      // Predicated region
      $region33: #{double_normal_block.5} parent=31 // pred_check
        %p178 = pneg %p31
      $region34: #{double_normal_block.5} parent=31 // pred_check_branch
        %180 = sbr.rel (%p178) target = $region36
      $region35: #{double_normal_block.5} parent=31 // pred_region
        %p181 = scmp.lt.s32.totalorder %s11, 3
        %s182 = scalar_select %p181, %s11, 3
        %s183 = smul.addr %s182, 8
        %s184 = scalar_lea.vmem %s0, %s183
      $region36: #{double_normal_block.5} parent=31 // pred_fallthru
        _
    $region32: #{double_normal_block.5} parent=5 // pred_fallthru
      _
    %p185 = scmp.le.s32.totalorder 1, %s11
    %p186 = scmp.lt.s32.totalorder %s11, 5
    %p187 = pnand %p185, %p186
    %p188 = pneg %p187
    // Predicated region
    $region37: #{double_normal_block.5} parent=5 // pred_check
      _
    $region38: #{double_normal_block.5} parent=5 // pred_check_branch
      %190 = sbr.rel (%p187) target = $region40
    $region39: #{double_normal_block.5} parent=5 // pred_region
      %s191 = ssub.s32 %s11, 1
      %p192 = scmp.lt.s32.totalorder %s16, 3
      %s193 = scalar_select %p192, %s16, 3
      %s194 = smul.addr %s193, 8
      %s195 = scalar_lea.vmem %s0, %s194
      %p196 = pneg %p37
      %p197 = pneg %p34
      %p198 = pneg %p58
      %p199 = pneg %p55
      %p200 = pneg %p79
      %p201 = pneg %p76
      %p202 = pneg %p100
      %p203 = pneg %p97
      %p204 = pneg %p121
      %p205 = pneg %p118
      %p206 = pneg %p147
      %p207 = pneg %p144
      %p208 = scmp.lt.s32.totalorder %s16, 3
      %s209 = scalar_select %p208, %s16, 3
      %s210 = smul.addr %s209, 8
      %s211 = scalar_lea.vmem %s5, %s210
      %p212 = scmp.lt.s32.totalorder %s16, 3
      %s213 = scalar_select %p212, %s16, 3
      %s214 = smul.addr %s213, 8
      %s215 = scalar_lea.vmem %s0, %s214
      %p216 = scmp.lt.s32.totalorder %s16, 3
      %s217 = scalar_select %p216, %s16, 3
      %s218 = smul.addr %s217, 8
      %s219 = scalar_lea.vmem %s5, %s218
      %v220 = vld [vmem:[%s1] sm:$0xff]
      %v221 = vmul.f32 %v220, 0.001953125
      %v222 = vld [vmem:[%s2] sm:$0xff]
      %v223 = vmul.f32 %v222, 0.001953125
      %v224 = vmul.f32 %v221, %v221
      %v225 = vsub.f32 %v223, %v224
      %v226 = vld [vmem:[%s3] sm:$0xff]
      %v227 = vadd.f32 %v225, 1e-05
      %v228 = vrsqrt.pop %v227
      %v229 = vmul.f32 %v226, %v228
      %v230 = vld [vmem:[%s4] sm:$0xff]
      %v231 = vmul.f32 %v221, %v229
      %v232 = vsub.f32 %v230, %v231
      %v233 = vld [vmem:[%s215] sm:$0xff]
      %235 = vset.pattern.permute.xlu0 0
      %236 = vperm.xlu0 %235, %v229
      %v237 = vpop.permute.xlu0 %236
      %v239 = vmul.f32 %v233, %v237
      %241 = vset.pattern.permute.xlu0 0
      %242 = vperm.xlu0 %241, %v232
      %v243 = vpop.permute.xlu0 %242
      %v245 = vadd.f32 %v239, %v243
      %v246 = vmax.f32 %v245, 0.0
      %247 = vst [vmem:[%s219] sm:$0xff] %v246
      %p248 = scmp.lt.s32.totalorder %s16, 3
      %s249 = scalar_select %p248, %s16, 3
      %s250 = smul.addr %s249, 8
      %s251 = scalar_lea.vmem %s5, %s250
      // Predicated region
      $region41: #{double_normal_block.5} parent=39 // pred_check
        %p252 = pneg %p144
      $region42: #{double_normal_block.5} parent=39 // pred_check_branch
        %254 = sbr.rel (%p252) target = $region44
      $region43: #{double_normal_block.5} parent=39 // pred_region
        _
      $region44: #{double_normal_block.5} parent=39 // pred_fallthru
        _
    $region40: #{double_normal_block.5} parent=5 // pred_fallthru
      _
    %p255 = scmp.le.s32.totalorder 2, %s11
    // Predicated region
    $region45: #{double_normal_block.5} parent=5 // pred_check
      %p256 = pneg %p255
    $region46: #{double_normal_block.5} parent=5 // pred_check_branch
      %258 = sbr.rel (%p256) target = $region48
    $region47: #{double_normal_block.5} parent=5 // pred_region
      %s259 = ssub.s32 %s11, 2
      // Predicated region
      $region49: #{double_normal_block.5} parent=47 // pred_check
        %p260 = pneg %p150
      $region50: #{double_normal_block.5} parent=47 // pred_check_branch
        %262 = sbr.rel (%p260) target = $region52
      $region51: #{double_normal_block.5} parent=47 // pred_region
        %p263 = scmp.lt.s32.totalorder %s17, 3
        %s264 = scalar_select %p263, %s17, 3
        %s265 = smul.addr %s264, 8
        %s266 = scalar_lea.vmem %s5, %s265
      $region52: #{double_normal_block.5} parent=47 // pred_fallthru
        _
    $region48: #{double_normal_block.5} parent=5 // pred_fallthru
      _
  $region6: #{double_normal_block.5} parent=0 // loop_footer
    %s15 = sadd.s32 1, %s11
  $region7: #{double_normal_block.5} parent=0 // loop_footer_branch
    %10 = sbr.rel target = $region3
  $region8: #{double_normal_block.5} parent=0 // loop_exit
    _

// kernel: double_normal_block.4
$region0: #{double_normal_block.4}
  #allocation0 [shape = 'u32[]', space=smem, size = 0x4, offset = 0x4, fixed_abs, tag = 'smem constant byte address 0x4 - core index']
  #allocation1 [shape = 'u32[144,128]{1,0:T(1,128)}', space=vmem, size = 0x12000, scoped, tag = 'internal scratch']
  %s0 = inlined_call_operand.vmem [shape: f32[8,36], index: 0, kind: input, shape index: {}]
  %s1 = inlined_call_operand.vmem [shape: f32[36,512], index: 1, kind: input, shape index: {}]
  %s2 = inlined_call_operand.vmem [shape: f32[8,512], index: 2, kind: output, shape index: {0}]
  %s3 = inlined_call_operand.vmem [shape: f32[8,1], index: 3, kind: output, shape index: {1}]
  %s4 = inlined_call_operand.vmem [shape: f32[8,1], index: 4, kind: output, shape index: {2}]
  %5 = xla_tuple %s2, %s3, %s4
  %s6 = sld [smem:[#allocation0]]
  $region99: #{double_normal_block.4} parent=0
    _
  %s8 = ssub.s32 1, %s6
  %s9 = scalar_select 0, %s8, %s6
  $region1: #{double_normal_block.4} parent=0
    #allocation2 [shape = 'u8[40960]{0}', space=vmem, size = 0xa000, scoped, tag = 'input window, operand 1']
    loop: start=0, step=1, limit=6
    $region2: #{double_normal_block.4} parent=1 // loop_pre_header
      _
    $region3: #{double_normal_block.4} parent=1 // loop_header
      %s11 = sphi 0, %s15
      %p12 = scmp.ge.s32.totalorder %s11, 6
      %s19 = sphi 0, %s19
      %s21 = sphi 0, %s19
      %s22 = sphi 0, %s21
      %s36 = sphi 0, %s22
      %s42 = sphi 0, %s44
      %s45 = sphi 0, %s42
      %s46 = sphi 0, %s45
      %s62 = sphi 0, %s46
      %s68 = sphi 0, %s70
      %s71 = sphi 0, %s68
      %s72 = sphi 0, %s71
      %s88 = sphi 0, %s72
      %s92 = sphi 0, %s92
      %s94 = sphi 0, %s92
      %s95 = sphi 0, %s94
      %s109 = sphi 0, %s95
      %s113 = sphi 0, %s113
      %s115 = sphi 0, %s113
      %s116 = sphi 0, %s115
      %s130 = sphi 0, %s116
    $region4: #{double_normal_block.4} parent=1 // loop_header_branch
      %14 = sbr.rel (%p12) target = $region8
    $region5: #{double_normal_block.4} parent=1 // loop_body
      %s16 = ssub.s32 %s11, 1
      %s17 = ssub.s32 %s11, 2
      %s18 = sadd.s32 %s11, 1
      %s20 = sadd.s32 %s19, 1
      %p23 = scmp.eq.s32.totalorder %s11, 3
      %p24 = scmp.ne.s32.totalorder %s19, %s21
      %p25 = scmp.eq.s32.totalorder %s11, 0
      %p26 = por %p24, %p25
      %p27 = scmp.ne.s32.totalorder %s19, %s21
      %p28 = scmp.eq.s32.totalorder %s16, 3
      %p29 = por %p27, %p28
      %p30 = scmp.ne.s32.totalorder %s21, %s22
      %p31 = scmp.eq.s32.totalorder %s16, 0
      %p32 = por %p30, %p31
      %p33 = scmp.ne.s32.totalorder %s21, %s22
      %p34 = scmp.eq.s32.totalorder %s17, 3
      %p35 = por %p33, %p34
      %p37 = scmp.ne.s32.totalorder %s22, %s36
      %p38 = scmp.eq.s32.totalorder %s17, 0
      %p39 = por %p37, %p38
      %s40 = ssub.s32 %s11, %s18
      %p41 = scmp.eq.s32.totalorder %s40, 0
      %s43 = sadd.s32 %s42, 1
      %s44 = scalar_select %p41, %s42, %s43
      %p47 = pneg %p41
      %p48 = scmp.eq.s32.totalorder %s11, 3
      %p49 = por %p47, %p48
      %p50 = scmp.ne.s32.totalorder %s42, %s45
      %p51 = scmp.eq.s32.totalorder %s11, 0
      %p52 = por %p50, %p51
      %p53 = scmp.ne.s32.totalorder %s42, %s45
      %p54 = scmp.eq.s32.totalorder %s16, 3
      %p55 = por %p53, %p54
      %p56 = scmp.ne.s32.totalorder %s45, %s46
      %p57 = scmp.eq.s32.totalorder %s16, 0
      %p58 = por %p56, %p57
      %p59 = scmp.ne.s32.totalorder %s45, %s46
      %p60 = scmp.eq.s32.totalorder %s17, 3
      %p61 = por %p59, %p60
      %p63 = scmp.ne.s32.totalorder %s46, %s62
      %p64 = scmp.eq.s32.totalorder %s17, 0
      %p65 = por %p63, %p64
      %s66 = ssub.s32 %s11, %s18
      %p67 = scmp.eq.s32.totalorder %s66, 0
      %s69 = sadd.s32 %s68, 1
      %s70 = scalar_select %p67, %s68, %s69
      %p73 = pneg %p67
      %p74 = scmp.eq.s32.totalorder %s11, 3
      %p75 = por %p73, %p74
      %p76 = scmp.ne.s32.totalorder %s68, %s71
      %p77 = scmp.eq.s32.totalorder %s11, 0
      %p78 = por %p76, %p77
      %p79 = scmp.ne.s32.totalorder %s68, %s71
      %p80 = scmp.eq.s32.totalorder %s16, 3
      %p81 = por %p79, %p80
      %p82 = scmp.ne.s32.totalorder %s71, %s72
      %p83 = scmp.eq.s32.totalorder %s16, 0
      %p84 = por %p82, %p83
      %p85 = scmp.ne.s32.totalorder %s71, %s72
      %p86 = scmp.eq.s32.totalorder %s17, 3
      %p87 = por %p85, %p86
      %p89 = scmp.ne.s32.totalorder %s72, %s88
      %p90 = scmp.eq.s32.totalorder %s17, 0
      %p91 = por %p89, %p90
      %s93 = sadd.s32 %s92, 1
      %p96 = scmp.eq.s32.totalorder %s11, 3
      %p97 = scmp.ne.s32.totalorder %s92, %s94
      %p98 = scmp.eq.s32.totalorder %s11, 0
      %p99 = por %p97, %p98
      %p100 = scmp.ne.s32.totalorder %s92, %s94
      %p101 = scmp.eq.s32.totalorder %s16, 3
      %p102 = por %p100, %p101
      %p103 = scmp.ne.s32.totalorder %s94, %s95
      %p104 = scmp.eq.s32.totalorder %s16, 0
      %p105 = por %p103, %p104
      %p106 = scmp.ne.s32.totalorder %s94, %s95
      %p107 = scmp.eq.s32.totalorder %s17, 3
      %p108 = por %p106, %p107
      %p110 = scmp.ne.s32.totalorder %s95, %s109
      %p111 = scmp.eq.s32.totalorder %s17, 0
      %p112 = por %p110, %p111
      %s114 = sadd.s32 %s113, 1
      %p117 = scmp.eq.s32.totalorder %s11, 3
      %p118 = scmp.ne.s32.totalorder %s113, %s115
      %p119 = scmp.eq.s32.totalorder %s11, 0
      %p120 = por %p118, %p119
      %p121 = scmp.ne.s32.totalorder %s113, %s115
      %p122 = scmp.eq.s32.totalorder %s16, 3
      %p123 = por %p121, %p122
      %p124 = scmp.ne.s32.totalorder %s115, %s116
      %p125 = scmp.eq.s32.totalorder %s16, 0
      %p126 = por %p124, %p125
      %p127 = scmp.ne.s32.totalorder %s115, %s116
      %p128 = scmp.eq.s32.totalorder %s17, 3
      %p129 = por %p127, %p128
      %p131 = scmp.ne.s32.totalorder %s116, %s130
      %p132 = scmp.eq.s32.totalorder %s17, 0
      %p133 = por %p131, %p132
      %p134 = scmp.le.s32.totalorder 1, %s11
      %p135 = scmp.lt.s32.totalorder %s11, 5
      %p136 = pnand %p134, %p135
      %p137 = pneg %p136
      // Predicated region
      $region9: #{double_normal_block.4} parent=5 // pred_check
        _
      $region10: #{double_normal_block.4} parent=5 // pred_check_branch
        %139 = sbr.rel (%p136) target = $region12
      $region11: #{double_normal_block.4} parent=5 // pred_region
        %s140 = ssub.s32 %s11, 1
        // Predicated region
        $region13: #{double_normal_block.4} parent=11 // pred_check
          %p141 = pneg %p32
        $region14: #{double_normal_block.4} parent=11 // pred_check_branch
          %143 = sbr.rel (%p141) target = $region16
        $region15: #{double_normal_block.4} parent=11 // pred_region
          _
        $region16: #{double_normal_block.4} parent=11 // pred_fallthru
          _
      $region12: #{double_normal_block.4} parent=5 // pred_fallthru
        _
      %p144 = scmp.lt.s32.totalorder %s11, 4
      // Predicated region
      $region17: #{double_normal_block.4} parent=5 // pred_check
        %p145 = pneg %p144
      $region18: #{double_normal_block.4} parent=5 // pred_check_branch
        %147 = sbr.rel (%p145) target = $region20
      $region19: #{double_normal_block.4} parent=5 // pred_region
        // Predicated region
        $region21: #{double_normal_block.4} parent=19 // pred_check
          %p148 = pneg %p52
        $region22: #{double_normal_block.4} parent=19 // pred_check_branch
          %150 = sbr.rel (%p148) target = $region24
        $region23: #{double_normal_block.4} parent=19 // pred_region
          %s151 = sand.u32 %s42, 1
          %s152 = sand.u32 %s42, 1
          %s153 = smul.addr %s152, 40
          %s154 = scalar_lea.vmem [#allocation2], %s153
          %s155 = smul.addr %s11, 8
          %s156 = scalar_lea.vmem %s1, %s155
          // Predicated region
          $region25: #{double_normal_block.4} parent=23 // pred_check
            _
          $region26: #{double_normal_block.4} parent=23 // pred_check_branch
            %158 = sbr.rel (0) target = $region28
          $region27: #{double_normal_block.4} parent=23 // pred_region
            // Predicated region
            $region29: #{double_normal_block.4} parent=27 // pred_check
              _
            $region30: #{double_normal_block.4} parent=27 // pred_check_branch
              %160 = sbr.rel (0) target = $region32
            $region31: #{double_normal_block.4} parent=27 // pred_region
              // Predicated region
              $region44: #{double_normal_block.4} parent=31 // pred_check
                _
              $region45: #{double_normal_block.4} parent=31 // pred_check_branch
                %183 = sbr.rel (0) target = $region47
              $region46: #{double_normal_block.4} parent=31 // pred_region
                loop: start=0, step=1, limit=1
                $region48: #{double_normal_block.4} parent=46 // loop_pre_header
                  _
                $region49: #{double_normal_block.4} parent=46 // loop_header
                  %s185 = sphi 0, %s189
                  %p186 = scmp.ge.s32.totalorder %s185, 1
                  %s190 = sphi %s156, %s156
                  %s191 = sphi %s154, %s154
                $region50: #{double_normal_block.4} parent=46 // loop_header_branch
                  %188 = sbr.rel (%p186) target = $region54
                $region51: #{double_normal_block.4} parent=46 // loop_body
                  %v192 = vld [vmem:[%s190] sm:$0xff]
                  %193 = vst [vmem:[%s191] sm:$0xff] %v192
                  %v194 = vld [vmem:[%s190 + $0x20] sm:$0xff]
                  %195 = vst [vmem:[%s191 + $0x8] sm:$0xff] %v194
                  %v196 = vld [vmem:[%s190 + $0x40] sm:$0xff]
                  %197 = vst [vmem:[%s191 + $0x10] sm:$0xff] %v196
                  %v198 = vld [vmem:[%s190 + $0x60] sm:$0xff]
                  %199 = vst [vmem:[%s191 + $0x18] sm:$0xff] %v198
                  %v200 = vld [vmem:[%s190 + $0x80] sm:$0xff]
                  %201 = vst [vmem:[%s191 + $0x20] sm:$0xff] %v200
                $region52: #{double_normal_block.4} parent=46 // loop_footer
                  %s189 = sadd.s32 1, %s185
                $region53: #{double_normal_block.4} parent=46 // loop_footer_branch
                  %184 = sbr.rel target = $region49
                $region54: #{double_normal_block.4} parent=46 // loop_exit
                  _
              $region47: #{double_normal_block.4} parent=31 // pred_fallthru
                _
              // Predicated region
              $region55: #{double_normal_block.4} parent=31 // pred_check
                _
              $region56: #{double_normal_block.4} parent=31 // pred_check_branch
                %203 = sbr.rel target = $region58
              $region57: #{double_normal_block.4} parent=31 // pred_region
                _
              $region58: #{double_normal_block.4} parent=31 // pred_fallthru
                _
            $region32: #{double_normal_block.4} parent=27 // pred_fallthru
              _
            // Predicated region
            $region33: #{double_normal_block.4} parent=27 // pred_check
              _
            $region34: #{double_normal_block.4} parent=27 // pred_check_branch
              %162 = sbr.rel target = $region36
            $region35: #{double_normal_block.4} parent=27 // pred_region
              loop: start=0, step=1, limit=1
              $region37: #{double_normal_block.4} parent=35 // loop_pre_header
                _
              $region38: #{double_normal_block.4} parent=35 // loop_header
                %s165 = sphi 0, %s169
                %p166 = scmp.ge.s32.totalorder %s165, 1
                %s170 = sphi %s156, %s156
                %s171 = sphi %s154, %s154
              $region39: #{double_normal_block.4} parent=35 // loop_header_branch
                %168 = sbr.rel (%p166) target = $region43
              $region40: #{double_normal_block.4} parent=35 // loop_body
                %v172 = vld [vmem:[%s170] sm:$0xff]
                %173 = vst [vmem:[%s171] sm:$0xff] %v172
                %v174 = vld [vmem:[%s170 + $0x20] sm:$0xff]
                %175 = vst [vmem:[%s171 + $0x8] sm:$0xff] %v174
                %v176 = vld [vmem:[%s170 + $0x40] sm:$0xff]
                %177 = vst [vmem:[%s171 + $0x10] sm:$0xff] %v176
                %v178 = vld [vmem:[%s170 + $0x60] sm:$0xff]
                %179 = vst [vmem:[%s171 + $0x18] sm:$0xff] %v178
                %v180 = vld [vmem:[%s170 + $0x80] sm:$0xff]
                %181 = vst [vmem:[%s171 + $0x20] sm:$0xff] %v180
              $region41: #{double_normal_block.4} parent=35 // loop_footer
                %s169 = sadd.s32 1, %s165
              $region42: #{double_normal_block.4} parent=35 // loop_footer_branch
                %164 = sbr.rel target = $region38
              $region43: #{double_normal_block.4} parent=35 // loop_exit
                _
            $region36: #{double_normal_block.4} parent=27 // pred_fallthru
              _
          $region28: #{double_normal_block.4} parent=23 // pred_fallthru
            _
          %204 = vnop
        $region24: #{double_normal_block.4} parent=19 // pred_fallthru
          _
      $region20: #{double_normal_block.4} parent=5 // pred_fallthru
        _
      %p205 = scmp.le.s32.totalorder 1, %s11
      %p206 = scmp.lt.s32.totalorder %s11, 5
      %p207 = pnand %p205, %p206
      %p208 = pneg %p207
      // Predicated region
      $region59: #{double_normal_block.4} parent=5 // pred_check
        _
      $region60: #{double_normal_block.4} parent=5 // pred_check_branch
        %210 = sbr.rel (%p207) target = $region62
      $region61: #{double_normal_block.4} parent=5 // pred_region
        %s211 = ssub.s32 %s11, 1
        %s212 = sand.u32 %s45, 1
        %s213 = sand.u32 %s45, 1
        %s214 = smul.addr %s213, 40
        %s215 = scalar_lea.vmem [#allocation2], %s214
        // Predicated region
        $region63: #{double_normal_block.4} parent=61 // pred_check
          %p216 = pneg %p58
        $region64: #{double_normal_block.4} parent=61 // pred_check_branch
          %218 = sbr.rel (%p216) target = $region66
        $region65: #{double_normal_block.4} parent=61 // pred_region
          _
        $region66: #{double_normal_block.4} parent=61 // pred_fallthru
          _
        %p219 = pneg %p32
        %p220 = pneg %p29
        %s221 = sand.u32 %s45, 1
        %s222 = sand.u32 %s45, 1
        %s223 = smul.addr %s222, 40
        %s224 = scalar_lea.vmem [#allocation2], %s223
        %p225 = pneg %p58
        %p226 = pneg %p55
        %p227 = pneg %p84
        %p228 = pneg %p81
        %p229 = scmp.lt.s32.totalorder %s16, 3
        %s230 = scalar_select %p229, %s16, 3
        %s231 = smul.addr %s230, 8
        %s232 = scalar_lea.vmem %s2, %s231
        %p233 = pneg %p105
        %p234 = pneg %p102
        %p235 = pneg %p126
        %p236 = pneg %p123
        %p237 = scmp.lt.s32.totalorder %s16, 3
        %s238 = scalar_select %p237, %s16, 3
        %s239 = smul.addr %s238, 8
        %s240 = scalar_lea.vmem %s2, %s239
        %p241 = scmp.eq.s32.totalorder %s16, 0
        // Predicated region
        $region67: #{double_normal_block.4} parent=61 // pred_check
          %p242 = pneg %p241
        $region68: #{double_normal_block.4} parent=61 // pred_check_branch
          %244 = sbr.rel (%p242) target = $region70
        $region69: #{double_normal_block.4} parent=61 // pred_region
          %vm245 = vcmask 7168
          %246 = vst.msk [vmem:[%s3] sm:$0xff] %vm245, 0.0
          %247 = vst.msk [vmem:[%s4] sm:$0xff] %vm245, 0.0
        $region70: #{double_normal_block.4} parent=61 // pred_fallthru
          _
        %v248 = vld [vmem:[%s0] sm:$0xff]
        %v249 = vld [vmem:[%s215] sm:$0xff]
        %v250 = vld [vmem:[%s215 + $0x8] sm:$0xff]
        %v251 = vld [vmem:[%s215 + $0x10] sm:$0xff]
        %v252 = vld [vmem:[%s215 + $0x18] sm:$0xff]
        %v253 = vld [vmem:[%s215 + $0x20] sm:$0xf]
        %vm254 = vcmask 293888
        %v256 = vsel %vm254, %v248, 0
        %vm258 = vcmask 1043456
        %v260 = vsel %vm258, %v253, 0
        %262 = vmatprep.subr.mxu0 0.0
        %263 = vmatpush1.msra.mxu0 %v249
        %264 = vmatprep.subr.mxu0 0.0
        %265 = vmatpush1.msra.mxu0 %v250
        %266 = vmatprep.subr.mxu0 0.0
        %267 = vmatpush1.msra.mxu0 %v251
        %268 = vmatprep.subr.mxu0 0.0
        %269 = vmatpush1.msra.mxu0 %v252
        %270 = vmatprep.subr.mxu0 0.0
        %271 = vmatpush1.msra.mxu0 %v260
        %272 = vmatprep.subr.mxu0 0.0
        %273 = vmatpush1.msra.mxu0 0.0
        %274 = vmatprep.subr.mxu0 0.0
        %275 = vmatpush1.msra.mxu0 0.0
        %276 = vmatprep.subr.mxu0 0.0
        %277 = vmatpush1.msra.mxu0 0.0
        %278 = vmatprep.subr.mxu0 0.0
        %279 = vmatpush1.msra.mxu0 0.0
        %280 = vmatprep.subr.mxu0 0.0
        %281 = vmatpush1.msra.mxu0 0.0
        %282 = vmatprep.subr.mxu0 0.0
        %283 = vmatpush1.msra.mxu0 0.0
        %284 = vmatprep.subr.mxu0 0.0
        %285 = vmatpush1.msra.mxu0 0.0
        %286 = vmatprep.subr.mxu0 0.0
        %287 = vmatpush1.msra.mxu0 0.0
        %288 = vmatprep.subr.mxu0 0.0
        %289 = vmatpush1.msra.mxu0 0.0
        %290 = vmatprep.subr.mxu0 0.0
        %291 = vmatpush1.msra.mxu0 0.0
        %292 = vmatprep.subr.mxu0 0.0
        %293 = vmatpush1.msra.mxu0 0.0
        %294 = vmatprep.subr.mxu0 0.0
        %295 = vmatpush1.msra.mxu0 0.0
        %296 = vmatprep.subr.mxu0 0.0
        %297 = vmatpush1.msra.mxu0 0.0
        %298 = vmatprep.subr.mxu0 0.0
        %299 = vmatpush1.msra.mxu0 0.0
        %300 = vmatprep.subr.mxu0 0.0
        %301 = vmatpush1.msra.mxu0 0.0
        %302 = vmatprep.subr.mxu0 0.0
        %303 = vmatpush1.msra.mxu0 0.0
        %304 = vmatprep.subr.mxu0 0.0
        %305 = vmatpush1.msra.mxu0 0.0
        %306 = vmatprep.subr.mxu0 0.0
        %307 = vmatpush1.msra.mxu0 0.0
        %308 = vmatprep.subr.mxu0 0.0
        %309 = vmatpush1.msra.mxu0 0.0
        %310 = vmatprep.subr.mxu0 0.0
        %311 = vmatpush1.msra.mxu0 0.0
        %312 = vmatprep.subr.mxu0 0.0
        %313 = vmatpush1.msra.mxu0 0.0
        %314 = vmatprep.subr.mxu0 0.0
        %315 = vmatpush1.msra.mxu0 0.0
        %316 = vmatprep.subr.mxu0 0.0
        %317 = vmatpush1.msra.mxu0 0.0
        %318 = vmatprep.subr.mxu0 0.0
        %319 = vmatpush1.msra.mxu0 0.0
        %320 = vmatprep.subr.mxu0 0.0
        %321 = vmatpush1.msra.mxu0 0.0
        %322 = vmatprep.subr.mxu0 0.0
        %323 = vmatpush1.msra.mxu0 0.0
        %324 = vmatprep.subr.mxu0 0.0
        %325 = vmatpush1.msra.mxu0 0.0
        %326 = vmatprep.mubr.f32.mxu0 0.0
        %327 = vmatmul.mubr.f32.gmra.mrb[0].mxu0 %v256
        %v328 = vpop.f32.mrb[0].mxu0
        %v329 = vadd.f32 0.0, %v328
        %v330 = vpop.f32.mrb[0].mxu0
        %331 = vdwg.mxu0
        %332 = vst [vmem:[%s240] sm:$0xff] %v329
        %v333 = vld [vmem:[%s3] sm:$0xff]
        %334 = vadd.xlane.f32.xlu0 %v329
        %v335 = vpop.xlane.xlu0 %334
        %v336 = vadd.f32 %v333, %v335
        %vm337 = vcmask 7168
        %338 = vst.msk [vmem:[%s3] sm:$0xff] %vm337, %v336
        %v339 = vld [vmem:[%s4] sm:$0xff]
        %v340 = vmul.f32 %v329, %v329
        %341 = vadd.xlane.f32.xlu0 %v340
        %v342 = vpop.xlane.xlu0 %341
        %v343 = vadd.f32 %v339, %v342
        %344 = vst.msk [vmem:[%s4] sm:$0xff] %vm337, %v343
        %p345 = scmp.lt.s32.totalorder %s16, 3
        %s346 = scalar_select %p345, %s16, 3
        %s347 = smul.addr %s346, 8
        %s348 = scalar_lea.vmem %s2, %s347
        // Predicated region
        $region71: #{double_normal_block.4} parent=61 // pred_check
          %p349 = pneg %p81
        $region72: #{double_normal_block.4} parent=61 // pred_check_branch
          %351 = sbr.rel (%p349) target = $region74
        $region73: #{double_normal_block.4} parent=61 // pred_region
          _
        $region74: #{double_normal_block.4} parent=61 // pred_fallthru
          _
        // Predicated region
        $region75: #{double_normal_block.4} parent=61 // pred_check
          %p352 = pneg %p102
        $region76: #{double_normal_block.4} parent=61 // pred_check_branch
          %354 = sbr.rel (%p352) target = $region78
        $region77: #{double_normal_block.4} parent=61 // pred_region
          _
        $region78: #{double_normal_block.4} parent=61 // pred_fallthru
          _
        // Predicated region
        $region79: #{double_normal_block.4} parent=61 // pred_check
          %p355 = pneg %p123
        $region80: #{double_normal_block.4} parent=61 // pred_check_branch
          %357 = sbr.rel (%p355) target = $region82
        $region81: #{double_normal_block.4} parent=61 // pred_region
          _
        $region82: #{double_normal_block.4} parent=61 // pred_fallthru
          _
        // Predicated region
        $region83: #{double_normal_block.4} parent=61 // pred_check
          %p358 = pneg %p102
        $region84: #{double_normal_block.4} parent=61 // pred_check_branch
          %360 = sbr.rel (%p358) target = $region86
        $region85: #{double_normal_block.4} parent=61 // pred_region
          _
        $region86: #{double_normal_block.4} parent=61 // pred_fallthru
          _
        // Predicated region
        $region87: #{double_normal_block.4} parent=61 // pred_check
          %p361 = pneg %p123
        $region88: #{double_normal_block.4} parent=61 // pred_check_branch
          %363 = sbr.rel (%p361) target = $region90
        $region89: #{double_normal_block.4} parent=61 // pred_region
          _
        $region90: #{double_normal_block.4} parent=61 // pred_fallthru
          _
      $region62: #{double_normal_block.4} parent=5 // pred_fallthru
        _
      %p364 = scmp.le.s32.totalorder 2, %s11
      // Predicated region
      $region91: #{double_normal_block.4} parent=5 // pred_check
        %p365 = pneg %p364
      $region92: #{double_normal_block.4} parent=5 // pred_check_branch
        %367 = sbr.rel (%p365) target = $region94
      $region93: #{double_normal_block.4} parent=5 // pred_region
        %s368 = ssub.s32 %s11, 2
        // Predicated region
        $region95: #{double_normal_block.4} parent=93 // pred_check
          %p369 = pneg %p87
        $region96: #{double_normal_block.4} parent=93 // pred_check_branch
          %371 = sbr.rel (%p369) target = $region98
        $region97: #{double_normal_block.4} parent=93 // pred_region
          %p372 = scmp.lt.s32.totalorder %s17, 3
          %s373 = scalar_select %p372, %s17, 3
          %s374 = smul.addr %s373, 8
          %s375 = scalar_lea.vmem %s2, %s374
        $region98: #{double_normal_block.4} parent=93 // pred_fallthru
          _
      $region94: #{double_normal_block.4} parent=5 // pred_fallthru
        _
    $region6: #{double_normal_block.4} parent=1 // loop_footer
      %s15 = sadd.s32 1, %s11
    $region7: #{double_normal_block.4} parent=1 // loop_footer_branch
      %10 = sbr.rel target = $region3
    $region8: #{double_normal_block.4} parent=1 // loop_exit
      _

// kernel: double_normal_block.6
$region0: #{double_normal_block.6}
  #allocation0 [shape = 'u32[]', space=smem, size = 0x4, offset = 0x4, fixed_abs, tag = 'smem constant byte address 0x4 - core index']
  #allocation1 [shape = 'u32[144,128]{1,0:T(1,128)}', space=vmem, size = 0x12000, scoped, tag = 'internal scratch']
  %s0 = inlined_call_operand.vmem [shape: f32[8,72], index: 0, kind: input, shape index: {}]
  %s1 = inlined_call_operand.vmem [shape: f32[72,512], index: 1, kind: input, shape index: {}]
  %s2 = inlined_call_operand.vmem [shape: f32[8,512], index: 2, kind: output, shape index: {0}]
  %s3 = inlined_call_operand.vmem [shape: f32[8,1], index: 3, kind: output, shape index: {1}]
  %s4 = inlined_call_operand.vmem [shape: f32[8,1], index: 4, kind: output, shape index: {2}]
  %5 = xla_tuple %s2, %s3, %s4
  %s6 = sld [smem:[#allocation0]]
  $region99: #{double_normal_block.6} parent=0
    _
  %s8 = ssub.s32 1, %s6
  %s9 = scalar_select 0, %s8, %s6
  $region1: #{double_normal_block.6} parent=0
    #allocation2 [shape = 'u8[73728]{0}', space=vmem, size = 0x12000, scoped, tag = 'input window, operand 1']
    loop: start=0, step=1, limit=6
    $region2: #{double_normal_block.6} parent=1 // loop_pre_header
      _
    $region3: #{double_normal_block.6} parent=1 // loop_header
      %s11 = sphi 0, %s15
      %p12 = scmp.ge.s32.totalorder %s11, 6
      %s19 = sphi 0, %s19
      %s21 = sphi 0, %s19
      %s22 = sphi 0, %s21
      %s36 = sphi 0, %s22
      %s42 = sphi 0, %s44
      %s45 = sphi 0, %s42
      %s46 = sphi 0, %s45
      %s62 = sphi 0, %s46
      %s68 = sphi 0, %s70
      %s71 = sphi 0, %s68
      %s72 = sphi 0, %s71
      %s88 = sphi 0, %s72
      %s92 = sphi 0, %s92
      %s94 = sphi 0, %s92
      %s95 = sphi 0, %s94
      %s109 = sphi 0, %s95
      %s113 = sphi 0, %s113
      %s115 = sphi 0, %s113
      %s116 = sphi 0, %s115
      %s130 = sphi 0, %s116
    $region4: #{double_normal_block.6} parent=1 // loop_header_branch
      %14 = sbr.rel (%p12) target = $region8
    $region5: #{double_normal_block.6} parent=1 // loop_body
      %s16 = ssub.s32 %s11, 1
      %s17 = ssub.s32 %s11, 2
      %s18 = sadd.s32 %s11, 1
      %s20 = sadd.s32 %s19, 1
      %p23 = scmp.eq.s32.totalorder %s11, 3
      %p24 = scmp.ne.s32.totalorder %s19, %s21
      %p25 = scmp.eq.s32.totalorder %s11, 0
      %p26 = por %p24, %p25
      %p27 = scmp.ne.s32.totalorder %s19, %s21
      %p28 = scmp.eq.s32.totalorder %s16, 3
      %p29 = por %p27, %p28
      %p30 = scmp.ne.s32.totalorder %s21, %s22
      %p31 = scmp.eq.s32.totalorder %s16, 0
      %p32 = por %p30, %p31
      %p33 = scmp.ne.s32.totalorder %s21, %s22
      %p34 = scmp.eq.s32.totalorder %s17, 3
      %p35 = por %p33, %p34
      %p37 = scmp.ne.s32.totalorder %s22, %s36
      %p38 = scmp.eq.s32.totalorder %s17, 0
      %p39 = por %p37, %p38
      %s40 = ssub.s32 %s11, %s18
      %p41 = scmp.eq.s32.totalorder %s40, 0
      %s43 = sadd.s32 %s42, 1
      %s44 = scalar_select %p41, %s42, %s43
      %p47 = pneg %p41
      %p48 = scmp.eq.s32.totalorder %s11, 3
      %p49 = por %p47, %p48
      %p50 = scmp.ne.s32.totalorder %s42, %s45
      %p51 = scmp.eq.s32.totalorder %s11, 0
      %p52 = por %p50, %p51
      %p53 = scmp.ne.s32.totalorder %s42, %s45
      %p54 = scmp.eq.s32.totalorder %s16, 3
      %p55 = por %p53, %p54
      %p56 = scmp.ne.s32.totalorder %s45, %s46
      %p57 = scmp.eq.s32.totalorder %s16, 0
      %p58 = por %p56, %p57
      %p59 = scmp.ne.s32.totalorder %s45, %s46
      %p60 = scmp.eq.s32.totalorder %s17, 3
      %p61 = por %p59, %p60
      %p63 = scmp.ne.s32.totalorder %s46, %s62
      %p64 = scmp.eq.s32.totalorder %s17, 0
      %p65 = por %p63, %p64
      %s66 = ssub.s32 %s11, %s18
      %p67 = scmp.eq.s32.totalorder %s66, 0
      %s69 = sadd.s32 %s68, 1
      %s70 = scalar_select %p67, %s68, %s69
      %p73 = pneg %p67
      %p74 = scmp.eq.s32.totalorder %s11, 3
      %p75 = por %p73, %p74
      %p76 = scmp.ne.s32.totalorder %s68, %s71
      %p77 = scmp.eq.s32.totalorder %s11, 0
      %p78 = por %p76, %p77
      %p79 = scmp.ne.s32.totalorder %s68, %s71
      %p80 = scmp.eq.s32.totalorder %s16, 3
      %p81 = por %p79, %p80
      %p82 = scmp.ne.s32.totalorder %s71, %s72
      %p83 = scmp.eq.s32.totalorder %s16, 0
      %p84 = por %p82, %p83
      %p85 = scmp.ne.s32.totalorder %s71, %s72
      %p86 = scmp.eq.s32.totalorder %s17, 3
      %p87 = por %p85, %p86
      %p89 = scmp.ne.s32.totalorder %s72, %s88
      %p90 = scmp.eq.s32.totalorder %s17, 0
      %p91 = por %p89, %p90
      %s93 = sadd.s32 %s92, 1
      %p96 = scmp.eq.s32.totalorder %s11, 3
      %p97 = scmp.ne.s32.totalorder %s92, %s94
      %p98 = scmp.eq.s32.totalorder %s11, 0
      %p99 = por %p97, %p98
      %p100 = scmp.ne.s32.totalorder %s92, %s94
      %p101 = scmp.eq.s32.totalorder %s16, 3
      %p102 = por %p100, %p101
      %p103 = scmp.ne.s32.totalorder %s94, %s95
      %p104 = scmp.eq.s32.totalorder %s16, 0
      %p105 = por %p103, %p104
      %p106 = scmp.ne.s32.totalorder %s94, %s95
      %p107 = scmp.eq.s32.totalorder %s17, 3
      %p108 = por %p106, %p107
      %p110 = scmp.ne.s32.totalorder %s95, %s109
      %p111 = scmp.eq.s32.totalorder %s17, 0
      %p112 = por %p110, %p111
      %s114 = sadd.s32 %s113, 1
      %p117 = scmp.eq.s32.totalorder %s11, 3
      %p118 = scmp.ne.s32.totalorder %s113, %s115
      %p119 = scmp.eq.s32.totalorder %s11, 0
      %p120 = por %p118, %p119
      %p121 = scmp.ne.s32.totalorder %s113, %s115
      %p122 = scmp.eq.s32.totalorder %s16, 3
      %p123 = por %p121, %p122
      %p124 = scmp.ne.s32.totalorder %s115, %s116
      %p125 = scmp.eq.s32.totalorder %s16, 0
      %p126 = por %p124, %p125
      %p127 = scmp.ne.s32.totalorder %s115, %s116
      %p128 = scmp.eq.s32.totalorder %s17, 3
      %p129 = por %p127, %p128
      %p131 = scmp.ne.s32.totalorder %s116, %s130
      %p132 = scmp.eq.s32.totalorder %s17, 0
      %p133 = por %p131, %p132
      %p134 = scmp.le.s32.totalorder 1, %s11
      %p135 = scmp.lt.s32.totalorder %s11, 5
      %p136 = pnand %p134, %p135
      %p137 = pneg %p136
      // Predicated region
      $region9: #{double_normal_block.6} parent=5 // pred_check
        _
      $region10: #{double_normal_block.6} parent=5 // pred_check_branch
        %139 = sbr.rel (%p136) target = $region12
      $region11: #{double_normal_block.6} parent=5 // pred_region
        %s140 = ssub.s32 %s11, 1
        // Predicated region
        $region13: #{double_normal_block.6} parent=11 // pred_check
          %p141 = pneg %p32
        $region14: #{double_normal_block.6} parent=11 // pred_check_branch
          %143 = sbr.rel (%p141) target = $region16
        $region15: #{double_normal_block.6} parent=11 // pred_region
          _
        $region16: #{double_normal_block.6} parent=11 // pred_fallthru
          _
      $region12: #{double_normal_block.6} parent=5 // pred_fallthru
        _
      %p144 = scmp.lt.s32.totalorder %s11, 4
      // Predicated region
      $region17: #{double_normal_block.6} parent=5 // pred_check
        %p145 = pneg %p144
      $region18: #{double_normal_block.6} parent=5 // pred_check_branch
        %147 = sbr.rel (%p145) target = $region20
      $region19: #{double_normal_block.6} parent=5 // pred_region
        // Predicated region
        $region21: #{double_normal_block.6} parent=19 // pred_check
          %p148 = pneg %p52
        $region22: #{double_normal_block.6} parent=19 // pred_check_branch
          %150 = sbr.rel (%p148) target = $region24
        $region23: #{double_normal_block.6} parent=19 // pred_region
          %s151 = sand.u32 %s42, 1
          %s152 = sand.u32 %s42, 1
          %s153 = smul.addr %s152, 72
          %s154 = scalar_lea.vmem [#allocation2], %s153
          %s155 = smul.addr %s11, 8
          %s156 = scalar_lea.vmem %s1, %s155
          // Predicated region
          $region25: #{double_normal_block.6} parent=23 // pred_check
            _
          $region26: #{double_normal_block.6} parent=23 // pred_check_branch
            %158 = sbr.rel (0) target = $region28
          $region27: #{double_normal_block.6} parent=23 // pred_region
            // Predicated region
            $region29: #{double_normal_block.6} parent=27 // pred_check
              _
            $region30: #{double_normal_block.6} parent=27 // pred_check_branch
              %160 = sbr.rel (0) target = $region32
            $region31: #{double_normal_block.6} parent=27 // pred_region
              // Predicated region
              $region44: #{double_normal_block.6} parent=31 // pred_check
                _
              $region45: #{double_normal_block.6} parent=31 // pred_check_branch
                %191 = sbr.rel (0) target = $region47
              $region46: #{double_normal_block.6} parent=31 // pred_region
                loop: start=0, step=1, limit=1
                $region48: #{double_normal_block.6} parent=46 // loop_pre_header
                  _
                $region49: #{double_normal_block.6} parent=46 // loop_header
                  %s193 = sphi 0, %s197
                  %p194 = scmp.ge.s32.totalorder %s193, 1
                  %s198 = sphi %s156, %s156
                  %s199 = sphi %s154, %s154
                $region50: #{double_normal_block.6} parent=46 // loop_header_branch
                  %196 = sbr.rel (%p194) target = $region54
                $region51: #{double_normal_block.6} parent=46 // loop_body
                  %v200 = vld [vmem:[%s198] sm:$0xff]
                  %201 = vst [vmem:[%s199] sm:$0xff] %v200
                  %v202 = vld [vmem:[%s198 + $0x20] sm:$0xff]
                  %203 = vst [vmem:[%s199 + $0x8] sm:$0xff] %v202
                  %v204 = vld [vmem:[%s198 + $0x40] sm:$0xff]
                  %205 = vst [vmem:[%s199 + $0x10] sm:$0xff] %v204
                  %v206 = vld [vmem:[%s198 + $0x60] sm:$0xff]
                  %207 = vst [vmem:[%s199 + $0x18] sm:$0xff] %v206
                  %v208 = vld [vmem:[%s198 + $0x80] sm:$0xff]
                  %209 = vst [vmem:[%s199 + $0x20] sm:$0xff] %v208
                  %v210 = vld [vmem:[%s198 + $0xa0] sm:$0xff]
                  %211 = vst [vmem:[%s199 + $0x28] sm:$0xff] %v210
                  %v212 = vld [vmem:[%s198 + $0xc0] sm:$0xff]
                  %213 = vst [vmem:[%s199 + $0x30] sm:$0xff] %v212
                  %v214 = vld [vmem:[%s198 + $0xe0] sm:$0xff]
                  %215 = vst [vmem:[%s199 + $0x38] sm:$0xff] %v214
                  %v216 = vld [vmem:[%s198 + $0x100] sm:$0xff]
                  %217 = vst [vmem:[%s199 + $0x40] sm:$0xff] %v216
                $region52: #{double_normal_block.6} parent=46 // loop_footer
                  %s197 = sadd.s32 1, %s193
                $region53: #{double_normal_block.6} parent=46 // loop_footer_branch
                  %192 = sbr.rel target = $region49
                $region54: #{double_normal_block.6} parent=46 // loop_exit
                  _
              $region47: #{double_normal_block.6} parent=31 // pred_fallthru
                _
              // Predicated region
              $region55: #{double_normal_block.6} parent=31 // pred_check
                _
              $region56: #{double_normal_block.6} parent=31 // pred_check_branch
                %219 = sbr.rel target = $region58
              $region57: #{double_normal_block.6} parent=31 // pred_region
                _
              $region58: #{double_normal_block.6} parent=31 // pred_fallthru
                _
            $region32: #{double_normal_block.6} parent=27 // pred_fallthru
              _
            // Predicated region
            $region33: #{double_normal_block.6} parent=27 // pred_check
              _
            $region34: #{double_normal_block.6} parent=27 // pred_check_branch
              %162 = sbr.rel target = $region36
            $region35: #{double_normal_block.6} parent=27 // pred_region
              loop: start=0, step=1, limit=1
              $region37: #{double_normal_block.6} parent=35 // loop_pre_header
                _
              $region38: #{double_normal_block.6} parent=35 // loop_header
                %s165 = sphi 0, %s169
                %p166 = scmp.ge.s32.totalorder %s165, 1
                %s170 = sphi %s156, %s156
                %s171 = sphi %s154, %s154
              $region39: #{double_normal_block.6} parent=35 // loop_header_branch
                %168 = sbr.rel (%p166) target = $region43
              $region40: #{double_normal_block.6} parent=35 // loop_body
                %v172 = vld [vmem:[%s170] sm:$0xff]
                %173 = vst [vmem:[%s171] sm:$0xff] %v172
                %v174 = vld [vmem:[%s170 + $0x20] sm:$0xff]
                %175 = vst [vmem:[%s171 + $0x8] sm:$0xff] %v174
                %v176 = vld [vmem:[%s170 + $0x40] sm:$0xff]
                %177 = vst [vmem:[%s171 + $0x10] sm:$0xff] %v176
                %v178 = vld [vmem:[%s170 + $0x60] sm:$0xff]
                %179 = vst [vmem:[%s171 + $0x18] sm:$0xff] %v178
                %v180 = vld [vmem:[%s170 + $0x80] sm:$0xff]
                %181 = vst [vmem:[%s171 + $0x20] sm:$0xff] %v180
                %v182 = vld [vmem:[%s170 + $0xa0] sm:$0xff]
                %183 = vst [vmem:[%s171 + $0x28] sm:$0xff] %v182
                %v184 = vld [vmem:[%s170 + $0xc0] sm:$0xff]
                %185 = vst [vmem:[%s171 + $0x30] sm:$0xff] %v184
                %v186 = vld [vmem:[%s170 + $0xe0] sm:$0xff]
                %187 = vst [vmem:[%s171 + $0x38] sm:$0xff] %v186
                %v188 = vld [vmem:[%s170 + $0x100] sm:$0xff]
                %189 = vst [vmem:[%s171 + $0x40] sm:$0xff] %v188
              $region41: #{double_normal_block.6} parent=35 // loop_footer
                %s169 = sadd.s32 1, %s165
              $region42: #{double_normal_block.6} parent=35 // loop_footer_branch
                %164 = sbr.rel target = $region38
              $region43: #{double_normal_block.6} parent=35 // loop_exit
                _
            $region36: #{double_normal_block.6} parent=27 // pred_fallthru
              _
          $region28: #{double_normal_block.6} parent=23 // pred_fallthru
            _
          %220 = vnop
        $region24: #{double_normal_block.6} parent=19 // pred_fallthru
          _
      $region20: #{double_normal_block.6} parent=5 // pred_fallthru
        _
      %p221 = scmp.le.s32.totalorder 1, %s11
      %p222 = scmp.lt.s32.totalorder %s11, 5
      %p223 = pnand %p221, %p222
      %p224 = pneg %p223
      // Predicated region
      $region59: #{double_normal_block.6} parent=5 // pred_check
        _
      $region60: #{double_normal_block.6} parent=5 // pred_check_branch
        %226 = sbr.rel (%p223) target = $region62
      $region61: #{double_normal_block.6} parent=5 // pred_region
        %s227 = ssub.s32 %s11, 1
        %s228 = sand.u32 %s45, 1
        %s229 = sand.u32 %s45, 1
        %s230 = smul.addr %s229, 72
        %s231 = scalar_lea.vmem [#allocation2], %s230
        // Predicated region
        $region63: #{double_normal_block.6} parent=61 // pred_check
          %p232 = pneg %p58
        $region64: #{double_normal_block.6} parent=61 // pred_check_branch
          %234 = sbr.rel (%p232) target = $region66
        $region65: #{double_normal_block.6} parent=61 // pred_region
          _
        $region66: #{double_normal_block.6} parent=61 // pred_fallthru
          _
        %p235 = pneg %p32
        %p236 = pneg %p29
        %s237 = sand.u32 %s45, 1
        %s238 = sand.u32 %s45, 1
        %s239 = smul.addr %s238, 72
        %s240 = scalar_lea.vmem [#allocation2], %s239
        %p241 = pneg %p58
        %p242 = pneg %p55
        %p243 = pneg %p84
        %p244 = pneg %p81
        %p245 = scmp.lt.s32.totalorder %s16, 3
        %s246 = scalar_select %p245, %s16, 3
        %s247 = smul.addr %s246, 8
        %s248 = scalar_lea.vmem %s2, %s247
        %p249 = pneg %p105
        %p250 = pneg %p102
        %p251 = pneg %p126
        %p252 = pneg %p123
        %p253 = scmp.lt.s32.totalorder %s16, 3
        %s254 = scalar_select %p253, %s16, 3
        %s255 = smul.addr %s254, 8
        %s256 = scalar_lea.vmem %s2, %s255
        %p257 = scmp.eq.s32.totalorder %s16, 0
        // Predicated region
        $region67: #{double_normal_block.6} parent=61 // pred_check
          %p258 = pneg %p257
        $region68: #{double_normal_block.6} parent=61 // pred_check_branch
          %260 = sbr.rel (%p258) target = $region70
        $region69: #{double_normal_block.6} parent=61 // pred_region
          %vm261 = vcmask 7168
          %262 = vst.msk [vmem:[%s3] sm:$0xff] %vm261, 0.0
          %263 = vst.msk [vmem:[%s4] sm:$0xff] %vm261, 0.0
        $region70: #{double_normal_block.6} parent=61 // pred_fallthru
          _
        %v264 = vld [vmem:[%s0] sm:$0xff]
        %v265 = vld [vmem:[%s231] sm:$0xff]
        %v266 = vld [vmem:[%s231 + $0x8] sm:$0xff]
        %v267 = vld [vmem:[%s231 + $0x10] sm:$0xff]
        %v268 = vld [vmem:[%s231 + $0x18] sm:$0xff]
        %v269 = vld [vmem:[%s231 + $0x20] sm:$0xff]
        %v270 = vld [vmem:[%s231 + $0x28] sm:$0xff]
        %v271 = vld [vmem:[%s231 + $0x30] sm:$0xff]
        %v272 = vld [vmem:[%s231 + $0x38] sm:$0xff]
        %v273 = vld [vmem:[%s231 + $0x40] sm:$0xff]
        %vm274 = vcmask 588800
        %v276 = vsel %vm274, %v264, 0
        %278 = vmatprep.subr.mxu0 0.0
        %279 = vmatpush1.msra.mxu0 %v265
        %280 = vmatprep.subr.mxu0 0.0
        %281 = vmatpush1.msra.mxu0 %v266
        %282 = vmatprep.subr.mxu0 0.0
        %283 = vmatpush1.msra.mxu0 %v267
        %284 = vmatprep.subr.mxu0 0.0
        %285 = vmatpush1.msra.mxu0 %v268
        %286 = vmatprep.subr.mxu0 0.0
        %287 = vmatpush1.msra.mxu0 %v269
        %288 = vmatprep.subr.mxu0 0.0
        %289 = vmatpush1.msra.mxu0 %v270
        %290 = vmatprep.subr.mxu0 0.0
        %291 = vmatpush1.msra.mxu0 %v271
        %292 = vmatprep.subr.mxu0 0.0
        %293 = vmatpush1.msra.mxu0 %v272
        %294 = vmatprep.subr.mxu0 0.0
        %295 = vmatpush1.msra.mxu0 %v273
        %296 = vmatprep.subr.mxu0 0.0
        %297 = vmatpush1.msra.mxu0 0.0
        %298 = vmatprep.subr.mxu0 0.0
        %299 = vmatpush1.msra.mxu0 0.0
        %300 = vmatprep.subr.mxu0 0.0
        %301 = vmatpush1.msra.mxu0 0.0
        %302 = vmatprep.subr.mxu0 0.0
        %303 = vmatpush1.msra.mxu0 0.0
        %304 = vmatprep.subr.mxu0 0.0
        %305 = vmatpush1.msra.mxu0 0.0
        %306 = vmatprep.subr.mxu0 0.0
        %307 = vmatpush1.msra.mxu0 0.0
        %308 = vmatprep.subr.mxu0 0.0
        %309 = vmatpush1.msra.mxu0 0.0
        %310 = vmatprep.subr.mxu0 0.0
        %311 = vmatpush1.msra.mxu0 0.0
        %312 = vmatprep.subr.mxu0 0.0
        %313 = vmatpush1.msra.mxu0 0.0
        %314 = vmatprep.subr.mxu0 0.0
        %315 = vmatpush1.msra.mxu0 0.0
        %316 = vmatprep.subr.mxu0 0.0
        %317 = vmatpush1.msra.mxu0 0.0
        %318 = vmatprep.subr.mxu0 0.0
        %319 = vmatpush1.msra.mxu0 0.0
        %320 = vmatprep.subr.mxu0 0.0
        %321 = vmatpush1.msra.mxu0 0.0
        %322 = vmatprep.subr.mxu0 0.0
        %323 = vmatpush1.msra.mxu0 0.0
        %324 = vmatprep.subr.mxu0 0.0
        %325 = vmatpush1.msra.mxu0 0.0
        %326 = vmatprep.subr.mxu0 0.0
        %327 = vmatpush1.msra.mxu0 0.0
        %328 = vmatprep.subr.mxu0 0.0
        %329 = vmatpush1.msra.mxu0 0.0
        %330 = vmatprep.subr.mxu0 0.0
        %331 = vmatpush1.msra.mxu0 0.0
        %332 = vmatprep.subr.mxu0 0.0
        %333 = vmatpush1.msra.mxu0 0.0
        %334 = vmatprep.subr.mxu0 0.0
        %335 = vmatpush1.msra.mxu0 0.0
        %336 = vmatprep.subr.mxu0 0.0
        %337 = vmatpush1.msra.mxu0 0.0
        %338 = vmatprep.subr.mxu0 0.0
        %339 = vmatpush1.msra.mxu0 0.0
        %340 = vmatprep.subr.mxu0 0.0
        %341 = vmatpush1.msra.mxu0 0.0
        %342 = vmatprep.mubr.f32.mxu0 0.0
        %343 = vmatmul.mubr.f32.gmra.mrb[0].mxu0 %v276
        %v344 = vpop.f32.mrb[0].mxu0
        %v345 = vadd.f32 0.0, %v344
        %v346 = vpop.f32.mrb[0].mxu0
        %347 = vdwg.mxu0
        %348 = vst [vmem:[%s256] sm:$0xff] %v345
        %v349 = vld [vmem:[%s3] sm:$0xff]
        %350 = vadd.xlane.f32.xlu0 %v345
        %v351 = vpop.xlane.xlu0 %350
        %v352 = vadd.f32 %v349, %v351
        %vm353 = vcmask 7168
        %354 = vst.msk [vmem:[%s3] sm:$0xff] %vm353, %v352
        %v355 = vld [vmem:[%s4] sm:$0xff]
        %v356 = vmul.f32 %v345, %v345
        %357 = vadd.xlane.f32.xlu0 %v356
        %v358 = vpop.xlane.xlu0 %357
        %v359 = vadd.f32 %v355, %v358
        %360 = vst.msk [vmem:[%s4] sm:$0xff] %vm353, %v359
        %p361 = scmp.lt.s32.totalorder %s16, 3
        %s362 = scalar_select %p361, %s16, 3
        %s363 = smul.addr %s362, 8
        %s364 = scalar_lea.vmem %s2, %s363
        // Predicated region
        $region71: #{double_normal_block.6} parent=61 // pred_check
          %p365 = pneg %p81
        $region72: #{double_normal_block.6} parent=61 // pred_check_branch
          %367 = sbr.rel (%p365) target = $region74
        $region73: #{double_normal_block.6} parent=61 // pred_region
          _
        $region74: #{double_normal_block.6} parent=61 // pred_fallthru
          _
        // Predicated region
        $region75: #{double_normal_block.6} parent=61 // pred_check
          %p368 = pneg %p102
        $region76: #{double_normal_block.6} parent=61 // pred_check_branch
          %370 = sbr.rel (%p368) target = $region78
        $region77: #{double_normal_block.6} parent=61 // pred_region
          _
        $region78: #{double_normal_block.6} parent=61 // pred_fallthru
          _
        // Predicated region
        $region79: #{double_normal_block.6} parent=61 // pred_check
          %p371 = pneg %p123
        $region80: #{double_normal_block.6} parent=61 // pred_check_branch
          %373 = sbr.rel (%p371) target = $region82
        $region81: #{double_normal_block.6} parent=61 // pred_region
          _
        $region82: #{double_normal_block.6} parent=61 // pred_fallthru
          _
        // Predicated region
        $region83: #{double_normal_block.6} parent=61 // pred_check
          %p374 = pneg %p102
        $region84: #{double_normal_block.6} parent=61 // pred_check_branch
          %376 = sbr.rel (%p374) target = $region86
        $region85: #{double_normal_block.6} parent=61 // pred_region
          _
        $region86: #{double_normal_block.6} parent=61 // pred_fallthru
          _
        // Predicated region
        $region87: #{double_normal_block.6} parent=61 // pred_check
          %p377 = pneg %p123
        $region88: #{double_normal_block.6} parent=61 // pred_check_branch
          %379 = sbr.rel (%p377) target = $region90
        $region89: #{double_normal_block.6} parent=61 // pred_region
          _
        $region90: #{double_normal_block.6} parent=61 // pred_fallthru
          _
      $region62: #{double_normal_block.6} parent=5 // pred_fallthru
        _
      %p380 = scmp.le.s32.totalorder 2, %s11
      // Predicated region
      $region91: #{double_normal_block.6} parent=5 // pred_check
        %p381 = pneg %p380
      $region92: #{double_normal_block.6} parent=5 // pred_check_branch
        %383 = sbr.rel (%p381) target = $region94
      $region93: #{double_normal_block.6} parent=5 // pred_region
        %s384 = ssub.s32 %s11, 2
        // Predicated region
        $region95: #{double_normal_block.6} parent=93 // pred_check
          %p385 = pneg %p87
        $region96: #{double_normal_block.6} parent=93 // pred_check_branch
          %387 = sbr.rel (%p385) target = $region98
        $region97: #{double_normal_block.6} parent=93 // pred_region
          %p388 = scmp.lt.s32.totalorder %s17, 3
          %s389 = scalar_select %p388, %s17, 3
          %s390 = smul.addr %s389, 8
          %s391 = scalar_lea.vmem %s2, %s390
        $region98: #{double_normal_block.6} parent=93 // pred_fallthru
          _
      $region94: #{double_normal_block.6} parent=5 // pred_fallthru
        _
    $region6: #{double_normal_block.6} parent=1 // loop_footer
      %s15 = sadd.s32 1, %s11
    $region7: #{double_normal_block.6} parent=1 // loop_footer_branch
      %10 = sbr.rel target = $region3
    $region8: #{double_normal_block.6} parent=1 // loop_exit
      _

</llo_original>
